<compile_context>
chip_gen: v7x
topology: tpu7x:2x2x1
jax: 0.10.0
libtpu: 0.0.40
codegen_flags: <defaults>
</compile_context>

<pallas_src>
import functools

import numpy as np
import jax
import jax.numpy as jnp
from jax.experimental import pallas as pl
from jax.experimental.pallas import tpu as pltpu


# ----------------------- Kernel A: fused KDE + FC -------------------------- #

def _kde_fc_kernel(x_ref, pool_ref, w1g_ref, b1_ref, w2_ref, b2_ref, attn_ref, *,
                   group, window, kernel_type, bandwidth, gamma):
    # x_ref    : (C, window, W)   one batch, one height band of `window` rows
    # pool_ref : (W, ww)          0/1 window-column pooling matrix
    # w1g_ref  : (G, Cr, c)       first 1x1 conv weight, split per group
    # b1_ref   : (Cr, 1)
    # w2_ref   : (C, Cr)
    # b2_ref   : (C, 1)
    # attn_ref : (C, ww)          attention for this (batch, window-row) band
    C, _, W = x_ref.shape
    G = group
    c = C // G
    ww = W // window
    Cr = w2_ref.shape[1]

    xb = x_ref[...].astype(jnp.float32)                 # (C, window, W)
    pool = pool_ref[...]                                # (W, ww)
    h2 = bandwidth * bandwidth

    # first 1x1 conv accumulated group-by-group: y1 = sum_g W1_g @ density_g
    y1 = jnp.zeros((Cr, ww), jnp.float32)
    for g in range(G):
        xg = xb[g * c:(g + 1) * c]                      # (c, window, W)
        # explicit pairwise channel differences on the VPU
        diff = xg[:, None, :, :] - xg[None, :, :, :]    # (c, c, window, W)
        lane_sq = jnp.sum(diff * diff, axis=2)          # (c, c, W)  (sublane sum)
        # per-window-column reduction over lanes via one matmul
        dist2 = jnp.dot(lane_sq.reshape(c * c, W), pool,
                        preferred_element_type=jnp.float32).reshape(c, c, ww)
        dist2 = jnp.maximum(dist2, 0.0)
        if kernel_type == 'gaussian':
            K = jnp.exp(-0.5 * dist2 / h2)
        elif kernel_type == 'laplacian':
            K = jnp.exp(-jnp.sqrt(dist2) / bandwidth)
        elif kernel_type == 'epanechnikov':
            u2 = dist2 / h2
            K = 0.75 * (1.0 - u2) * (u2 <= 1.0).astype(jnp.float32)
        else:
            raise ValueError(f"Unsupported kernel: {kernel_type}")
        dens_g = jnp.mean(K, axis=1)                    # (c, ww)
        y1 = y1 + jnp.dot(w1g_ref[g], dens_g,
                          preferred_element_type=jnp.float32)   # (Cr, ww)

    y1 = jnp.maximum(y1 + b1_ref[...], 0.0)             # ReLU
    y2 = jnp.dot(w2_ref[...], y1, preferred_element_type=jnp.float32) + b2_ref[...]
    attn_ref[...] = jax.nn.sigmoid(y2) + gamma          # (C, ww)


# --------- Kernel B: separable bilinear upsample fused with x * up --------- #

def _upsample_mul_kernel(attn_ref, uh_ref, uwt_ref, x_ref, out_ref):
    # attn_ref : (hh, tc, ww) ; uh_ref : (H, hh) ; uwt_ref : (ww, W)
    # x_ref / out_ref : (tc, H, W)
    uh = uh_ref[...]
    uwt = uwt_ref[...]
    a = attn_ref[...]                                   # (hh, tc, ww)
    tc = x_ref.shape[0]
    for ci in range(tc):                                # static unroll (tc kept small)
        a_c = a[:, ci, :]                               # (hh, ww)
        rows = jnp.dot(uh, a_c, preferred_element_type=jnp.float32)   # (H, ww)
        up_c = jnp.dot(rows, uwt, preferred_element_type=jnp.float32) # (H, W)
        out_ref[ci] = x_ref[ci] * up_c


# ------------------------------- host glue --------------------------------- #

def _bilinear_matrix(n_in, n_out):
    """1-D bilinear interpolation matrix (n_out, n_in), align_corners=True."""
    U = np.zeros((n_out, n_in), dtype=np.float32)
    for i in range(n_out):
        src = 0.0 if n_out == 1 else i * (n_in - 1) / (n_out - 1)
        i0 = min(max(int(np.floor(src)), 0), n_in - 1)
        i1 = min(i0 + 1, n_in - 1)
        frac = src - i0
        U[i, i0] += 1.0 - frac
        U[i, i1] += frac
    return U


def _pool_matrix(W, window):
    ww = W // window
    P = np.zeros((W, ww), dtype=np.float32)
    for w in range(ww):
        P[w * window:(w + 1) * window, w] = 1.0
    return P


def _pick_channel_tile(C, bytes_per_channel, target_bytes=2 << 20, max_unroll=32):
    """Largest channel tile that divides C, is a multiple of 8 (or == C),
    keeps x/out blocks ~<=2 MiB, and keeps the in-kernel unroll small."""
    cands = [d for d in range(1, C + 1) if C % d == 0 and (d % 8 == 0 or d == C)]
    good = [d for d in cands if d * bytes_per_channel <= target_bytes and d <= max_unroll]
    if good:
        return max(good)
    small = [d for d in cands if d <= max_unroll]
    return min(small) if small else min(cands)


def kde_attention_v2(x, w1, b1, w2, b2, *, group=4, window=8, gamma=0.5,
                     kernel='gaussian', h_bw=1.0):
    b, C, H, W = x.shape
    G = group
    assert C % G == 0, "channel must be divisible by group"
    assert H % window == 0 and W % window == 0, "spatial dims must divide window"
    if window % 8 != 0 and window != H:
        # TODO(synk): support window sizes that are not sublane(8)-aligned.
        raise NotImplementedError("window must be a multiple of 8 (or equal H)")
    c = C // G
    hh, ww = H // window, W // window
    Cr = w1.shape[0]

    x = x.astype(jnp.float32)
    w1g = w1.astype(jnp.float32).reshape(Cr, G, c).transpose(1, 0, 2)   # (G, Cr, c)
    w2c = w2.astype(jnp.float32)                                        # (C, Cr)
    b1c = b1.astype(jnp.float32).reshape(Cr, 1)
    b2c = b2.astype(jnp.float32).reshape(C, 1)
    pool = jnp.asarray(_pool_matrix(W, window))                         # (W, ww)
    Uh = jnp.asarray(_bilinear_matrix(hh, H))                           # (H, hh)
    UwT = jnp.asarray(_bilinear_matrix(ww, W).T)                        # (ww, W)

    # ---- Kernel A: fused KDE density + 1x1-conv attention, grid (b, hh) ----
    attn = pl.pallas_call(
        functools.partial(_kde_fc_kernel, group=G, window=window,
                          kernel_type=kernel, bandwidth=h_bw, gamma=gamma),
        out_shape=jax.ShapeDtypeStruct((b, hh, C, ww), jnp.float32),
        grid=(b, hh),
        in_specs=[
            pl.BlockSpec((None, C, window, W), lambda bi, hi: (bi, 0, hi, 0)),
            pl.BlockSpec((W, ww), lambda bi, hi: (0, 0)),
            pl.BlockSpec((G, Cr, c), lambda bi, hi: (0, 0, 0)),
            pl.BlockSpec((Cr, 1), lambda bi, hi: (0, 0)),
            pl.BlockSpec((C, Cr), lambda bi, hi: (0, 0)),
            pl.BlockSpec((C, 1), lambda bi, hi: (0, 0)),
        ],
        out_specs=pl.BlockSpec((None, None, C, ww), lambda bi, hi: (bi, hi, 0, 0)),
        compiler_params=pltpu.CompilerParams(
            dimension_semantics=("parallel", "parallel")),
    )(x, pool, w1g, b1c, w2c, b2c)

    # ---- Kernel B: separable bilinear upsample fused with x * attn ----
    tc = _pick_channel_tile(C, H * W * 4)
    out = pl.pallas_call(
        _upsample_mul_kernel,
        out_shape=jax.ShapeDtypeStruct((b, C, H, W), jnp.float32),
        grid=(b, C // tc),
        in_specs=[
            pl.BlockSpec((None, hh, tc, ww), lambda bi, ci: (bi, 0, ci, 0)),
            pl.BlockSpec((H, hh), lambda bi, ci: (0, 0)),
            pl.BlockSpec((ww, W), lambda bi, ci: (0, 0)),
            pl.BlockSpec((None, tc, H, W), lambda bi, ci: (bi, ci, 0, 0)),
        ],
        out_specs=pl.BlockSpec((None, tc, H, W), lambda bi, ci: (bi, ci, 0, 0)),
        compiler_params=pltpu.CompilerParams(
            dimension_semantics=("parallel", "parallel")),
    )(attn, Uh, UwT, x)
    return out


# --------------------------- pure-JAX reference ----------------------------- #

def _reference(x, w1, b1, w2, b2, *, group, window, gamma, h_bw):
    b, C, H, W = x.shape
    G, c = group, C // group
    hh, ww = H // window, W // window
    S = window * window
    ghx = x.reshape(b, G, c, hh, window, ww, window)
    ghx = ghx.transpose(0, 1, 3, 5, 2, 4, 6).reshape(-1, c, S)
    diff = ghx[:, None, :, :] - ghx[:, :, None, :]
    dist = jnp.linalg.norm(diff, axis=-1)
    K = jnp.exp(-0.5 * (dist / h_bw) ** 2)
    density = K.mean(axis=-1)
    density = density.reshape(b, G, hh, ww, c).transpose(0, 1, 4, 2, 3).reshape(b, C, hh, ww)
    y1 = jnp.maximum(jnp.einsum('oc,bchw->bohw', w1, density) + b1[None, :, None, None], 0.0)
    y2 = jax.nn.sigmoid(jnp.einsum('oc,bchw->bohw', w2, y1) + b2[None, :, None, None])
    attn = y2 + gamma
    Uh = jnp.asarray(_bilinear_matrix(hh, H))
    Uw = jnp.asarray(_bilinear_matrix(ww, W))
    up = jnp.einsum('ip,bcpq,jq->bcij', Uh, attn, Uw)
    return x * up


# ----------------------------------- main ----------------------------------- #

if __name__ == "__main__":
    channel, reduction, group, window = 16, 4, 4, 8
    b, H, W = 2, 16, 16
    Cr = channel // reduction

    key = jax.random.PRNGKey(0)
    kx, kw1, kb1, kw2, kb2 = jax.random.split(key, 5)
    x = jax.random.normal(kx, (b, channel, H, W), jnp.float32)
    # Conv2d(channel, channel//reduction, 1) -> (Cr, C); Conv2d(Cr, channel, 1) -> (C, Cr)
    w1 = 0.1 * jax.random.normal(kw1, (Cr, channel), jnp.float32)
    b1 = 0.1 * jax.random.normal(kb1, (Cr,), jnp.float32)
    w2 = 0.1 * jax.random.normal(kw2, (channel, Cr), jnp.float32)
    b2 = 0.1 * jax.random.normal(kb2, (channel,), jnp.float32)

    out = kde_attention_v2(x, w1, b1, w2, b2, group=group, window=window,
                           gamma=0.5, kernel='gaussian', h_bw=1.0)
    out = jax.block_until_ready(out)

    ref = _reference(x, w1, b1, w2, b2, group=group, window=window,
                     gamma=0.5, h_bw=1.0)
    assert out.shape == (b, channel, H, W)
    assert jnp.allclose(out, ref, atol=1e-3, rtol=1e-3), \
        float(jnp.max(jnp.abs(out - ref)))
    print("KERNEL_OK")
</pallas_src>

<mosaic_0001>
module attributes {stable_mosaic.version = 11 : i64} {
  func.func @_kde_fc_kernel(%arg0: i32, %arg1: i32, %arg2: memref<1x16x8x16xf32, #tpu.memory_space<vmem>>, %arg3: memref<16x2xf32, #tpu.memory_space<vmem>>, %arg4: memref<4x4x4xf32, #tpu.memory_space<vmem>>, %arg5: memref<4x1xf32, #tpu.memory_space<vmem>>, %arg6: memref<16x4xf32, #tpu.memory_space<vmem>>, %arg7: memref<16x1xf32, #tpu.memory_space<vmem>>, %arg8: memref<1x1x16x2xf32, #tpu.memory_space<vmem>>) attributes {dimension_semantics = [#tpu.dimension_semantics<parallel>, #tpu.dimension_semantics<parallel>], iteration_bounds = array<i64: 2, 2>, scalar_prefetch = 0 : i64, scratch_operands = 0 : i64, tpu.core_type = #tpu.core_type<tc>, window_params = [{transform_indices = @transform_0, window_bounds = array<i64: 1, 16, 8, 16>}, {pipeline_mode = #tpu.pipeline_mode<synchronous>, transform_indices = @transform_1, window_bounds = array<i64: 16, 2>}, {pipeline_mode = #tpu.pipeline_mode<synchronous>, transform_indices = @transform_2, window_bounds = array<i64: 4, 4, 4>}, {pipeline_mode = #tpu.pipeline_mode<synchronous>, transform_indices = @transform_3, window_bounds = array<i64: 4, 1>}, {pipeline_mode = #tpu.pipeline_mode<synchronous>, transform_indices = @transform_4, window_bounds = array<i64: 16, 4>}, {pipeline_mode = #tpu.pipeline_mode<synchronous>, transform_indices = @transform_5, window_bounds = array<i64: 16, 1>}, {transform_indices = @transform_6, window_bounds = array<i64: 1, 1, 16, 2>}]} {
    %c0 = arith.constant 0 : index
    %c0_0 = arith.constant 0 : index
    %c0_1 = arith.constant 0 : index
    %c0_2 = arith.constant 0 : index
    %0 = vector.load %arg2[%c0, %c0_0, %c0_1, %c0_2] : memref<1x16x8x16xf32, #tpu.memory_space<vmem>>, vector<1x16x8x16xf32>
    %1 = vector.shape_cast %0 : vector<1x16x8x16xf32> to vector<16x8x16xf32>
    %c0_3 = arith.constant 0 : index
    %c0_4 = arith.constant 0 : index
    %2 = vector.load %arg3[%c0_3, %c0_4] : memref<16x2xf32, #tpu.memory_space<vmem>>, vector<16x2xf32>
    %cst = arith.constant 0.000000e+00 : f32
    %3 = vector.broadcast %cst : f32 to vector<4x2xf32>
    %4 = vector.extract_strided_slice %1 {offsets = [0, 0, 0], sizes = [4, 8, 16], strides = [1, 1, 1]} : vector<16x8x16xf32> to vector<4x8x16xf32>
    %5 = vector.shape_cast %4 : vector<4x8x16xf32> to vector<4x1x8x16xf32>
    %6 = vector.shape_cast %4 : vector<4x8x16xf32> to vector<1x4x8x16xf32>
    %7 = vector.broadcast %5 : vector<4x1x8x16xf32> to vector<4x4x8x16xf32>
    %8 = vector.broadcast %6 : vector<1x4x8x16xf32> to vector<4x4x8x16xf32>
    %9 = arith.subf %7, %8 : vector<4x4x8x16xf32>
    %10 = arith.mulf %9, %9 : vector<4x4x8x16xf32>
    %cst_5 = arith.constant dense<0.000000e+00> : vector<4x4x16xf32>
    %11 = vector.multi_reduction <add>, %10, %cst_5 [2] : vector<4x4x8x16xf32> to vector<4x4x16xf32>
    %12 = vector.shape_cast %11 : vector<4x4x16xf32> to vector<16x16xf32>
    %cst_6 = arith.constant dense<0.000000e+00> : vector<16x2xf32>
    %13 = tpu.matmul %12, %2, %cst_6 {dimension_numbers = #tpu.dot_dimension_numbers<[1], [0], [0], [1], [0, 0, 1, 1], [], []>} : vector<16x16xf32>, vector<16x2xf32>, vector<16x2xf32> -> vector<16x2xf32>
    %14 = vector.shape_cast %13 : vector<16x2xf32> to vector<4x4x2xf32>
    %cst_7 = arith.constant 0.000000e+00 : f32
    %15 = vector.broadcast %cst_7 : f32 to vector<4x4x2xf32>
    %16 = arith.maximumf %14, %15 : vector<4x4x2xf32>
    %cst_8 = arith.constant -5.000000e-01 : f32
    %17 = vector.broadcast %cst_8 : f32 to vector<4x4x2xf32>
    %18 = arith.mulf %17, %16 : vector<4x4x2xf32>
    %cst_9 = arith.constant 1.000000e+00 : f32
    %19 = vector.broadcast %cst_9 : f32 to vector<4x4x2xf32>
    %20 = arith.divf %18, %19 : vector<4x4x2xf32>
    %21 = math.exp %20 : vector<4x4x2xf32>
    %cst_10 = arith.constant dense<0.000000e+00> : vector<4x2xf32>
    %22 = vector.multi_reduction <add>, %21, %cst_10 [1] : vector<4x4x2xf32> to vector<4x2xf32>
    %cst_11 = arith.constant 4.000000e+00 : f32
    %23 = vector.broadcast %cst_11 : f32 to vector<4x2xf32>
    %24 = arith.divf %22, %23 : vector<4x2xf32>
    %c0_12 = arith.constant 0 : index
    %c0_13 = arith.constant 0 : index
    %c0_14 = arith.constant 0 : index
    %25 = vector.load %arg4[%c0_12, %c0_13, %c0_14] : memref<4x4x4xf32, #tpu.memory_space<vmem>>, vector<1x4x4xf32>
    %26 = vector.shape_cast %25 : vector<1x4x4xf32> to vector<4x4xf32>
    %cst_15 = arith.constant dense<0.000000e+00> : vector<4x2xf32>
    %27 = tpu.matmul %26, %24, %cst_15 {dimension_numbers = #tpu.dot_dimension_numbers<[1], [0], [0], [1], [0, 0, 1, 1], [], []>} : vector<4x4xf32>, vector<4x2xf32>, vector<4x2xf32> -> vector<4x2xf32>
    %28 = arith.addf %3, %27 : vector<4x2xf32>
    %29 = vector.extract_strided_slice %1 {offsets = [4, 0, 0], sizes = [4, 8, 16], strides = [1, 1, 1]} : vector<16x8x16xf32> to vector<4x8x16xf32>
    %30 = vector.shape_cast %29 : vector<4x8x16xf32> to vector<4x1x8x16xf32>
    %31 = vector.shape_cast %29 : vector<4x8x16xf32> to vector<1x4x8x16xf32>
    %32 = vector.broadcast %30 : vector<4x1x8x16xf32> to vector<4x4x8x16xf32>
    %33 = vector.broadcast %31 : vector<1x4x8x16xf32> to vector<4x4x8x16xf32>
    %34 = arith.subf %32, %33 : vector<4x4x8x16xf32>
    %35 = arith.mulf %34, %34 : vector<4x4x8x16xf32>
    %cst_16 = arith.constant dense<0.000000e+00> : vector<4x4x16xf32>
    %36 = vector.multi_reduction <add>, %35, %cst_16 [2] : vector<4x4x8x16xf32> to vector<4x4x16xf32>
    %37 = vector.shape_cast %36 : vector<4x4x16xf32> to vector<16x16xf32>
    %cst_17 = arith.constant dense<0.000000e+00> : vector<16x2xf32>
    %38 = tpu.matmul %37, %2, %cst_17 {dimension_numbers = #tpu.dot_dimension_numbers<[1], [0], [0], [1], [0, 0, 1, 1], [], []>} : vector<16x16xf32>, vector<16x2xf32>, vector<16x2xf32> -> vector<16x2xf32>
    %39 = vector.shape_cast %38 : vector<16x2xf32> to vector<4x4x2xf32>
    %cst_18 = arith.constant 0.000000e+00 : f32
    %40 = vector.broadcast %cst_18 : f32 to vector<4x4x2xf32>
    %41 = arith.maximumf %39, %40 : vector<4x4x2xf32>
    %cst_19 = arith.constant -5.000000e-01 : f32
    %42 = vector.broadcast %cst_19 : f32 to vector<4x4x2xf32>
    %43 = arith.mulf %42, %41 : vector<4x4x2xf32>
    %cst_20 = arith.constant 1.000000e+00 : f32
    %44 = vector.broadcast %cst_20 : f32 to vector<4x4x2xf32>
    %45 = arith.divf %43, %44 : vector<4x4x2xf32>
    %46 = math.exp %45 : vector<4x4x2xf32>
    %cst_21 = arith.constant dense<0.000000e+00> : vector<4x2xf32>
    %47 = vector.multi_reduction <add>, %46, %cst_21 [1] : vector<4x4x2xf32> to vector<4x2xf32>
    %cst_22 = arith.constant 4.000000e+00 : f32
    %48 = vector.broadcast %cst_22 : f32 to vector<4x2xf32>
    %49 = arith.divf %47, %48 : vector<4x2xf32>
    %c1 = arith.constant 1 : index
    %c0_23 = arith.constant 0 : index
    %c0_24 = arith.constant 0 : index
    %50 = vector.load %arg4[%c1, %c0_23, %c0_24] : memref<4x4x4xf32, #tpu.memory_space<vmem>>, vector<1x4x4xf32>
    %51 = vector.shape_cast %50 : vector<1x4x4xf32> to vector<4x4xf32>
    %cst_25 = arith.constant dense<0.000000e+00> : vector<4x2xf32>
    %52 = tpu.matmul %51, %49, %cst_25 {dimension_numbers = #tpu.dot_dimension_numbers<[1], [0], [0], [1], [0, 0, 1, 1], [], []>} : vector<4x4xf32>, vector<4x2xf32>, vector<4x2xf32> -> vector<4x2xf32>
    %53 = arith.addf %28, %52 : vector<4x2xf32>
    %54 = vector.extract_strided_slice %1 {offsets = [8, 0, 0], sizes = [4, 8, 16], strides = [1, 1, 1]} : vector<16x8x16xf32> to vector<4x8x16xf32>
    %55 = vector.shape_cast %54 : vector<4x8x16xf32> to vector<4x1x8x16xf32>
    %56 = vector.shape_cast %54 : vector<4x8x16xf32> to vector<1x4x8x16xf32>
    %57 = vector.broadcast %55 : vector<4x1x8x16xf32> to vector<4x4x8x16xf32>
    %58 = vector.broadcast %56 : vector<1x4x8x16xf32> to vector<4x4x8x16xf32>
    %59 = arith.subf %57, %58 : vector<4x4x8x16xf32>
    %60 = arith.mulf %59, %59 : vector<4x4x8x16xf32>
    %cst_26 = arith.constant dense<0.000000e+00> : vector<4x4x16xf32>
    %61 = vector.multi_reduction <add>, %60, %cst_26 [2] : vector<4x4x8x16xf32> to vector<4x4x16xf32>
    %62 = vector.shape_cast %61 : vector<4x4x16xf32> to vector<16x16xf32>
    %cst_27 = arith.constant dense<0.000000e+00> : vector<16x2xf32>
    %63 = tpu.matmul %62, %2, %cst_27 {dimension_numbers = #tpu.dot_dimension_numbers<[1], [0], [0], [1], [0, 0, 1, 1], [], []>} : vector<16x16xf32>, vector<16x2xf32>, vector<16x2xf32> -> vector<16x2xf32>
    %64 = vector.shape_cast %63 : vector<16x2xf32> to vector<4x4x2xf32>
    %cst_28 = arith.constant 0.000000e+00 : f32
    %65 = vector.broadcast %cst_28 : f32 to vector<4x4x2xf32>
    %66 = arith.maximumf %64, %65 : vector<4x4x2xf32>
    %cst_29 = arith.constant -5.000000e-01 : f32
    %67 = vector.broadcast %cst_29 : f32 to vector<4x4x2xf32>
    %68 = arith.mulf %67, %66 : vector<4x4x2xf32>
    %cst_30 = arith.constant 1.000000e+00 : f32
    %69 = vector.broadcast %cst_30 : f32 to vector<4x4x2xf32>
    %70 = arith.divf %68, %69 : vector<4x4x2xf32>
    %71 = math.exp %70 : vector<4x4x2xf32>
    %cst_31 = arith.constant dense<0.000000e+00> : vector<4x2xf32>
    %72 = vector.multi_reduction <add>, %71, %cst_31 [1] : vector<4x4x2xf32> to vector<4x2xf32>
    %cst_32 = arith.constant 4.000000e+00 : f32
    %73 = vector.broadcast %cst_32 : f32 to vector<4x2xf32>
    %74 = arith.divf %72, %73 : vector<4x2xf32>
    %c2 = arith.constant 2 : index
    %c0_33 = arith.constant 0 : index
    %c0_34 = arith.constant 0 : index
    %75 = vector.load %arg4[%c2, %c0_33, %c0_34] : memref<4x4x4xf32, #tpu.memory_space<vmem>>, vector<1x4x4xf32>
    %76 = vector.shape_cast %75 : vector<1x4x4xf32> to vector<4x4xf32>
    %cst_35 = arith.constant dense<0.000000e+00> : vector<4x2xf32>
    %77 = tpu.matmul %76, %74, %cst_35 {dimension_numbers = #tpu.dot_dimension_numbers<[1], [0], [0], [1], [0, 0, 1, 1], [], []>} : vector<4x4xf32>, vector<4x2xf32>, vector<4x2xf32> -> vector<4x2xf32>
    %78 = arith.addf %53, %77 : vector<4x2xf32>
    %79 = vector.extract_strided_slice %1 {offsets = [12, 0, 0], sizes = [4, 8, 16], strides = [1, 1, 1]} : vector<16x8x16xf32> to vector<4x8x16xf32>
    %80 = vector.shape_cast %79 : vector<4x8x16xf32> to vector<4x1x8x16xf32>
    %81 = vector.shape_cast %79 : vector<4x8x16xf32> to vector<1x4x8x16xf32>
    %82 = vector.broadcast %80 : vector<4x1x8x16xf32> to vector<4x4x8x16xf32>
    %83 = vector.broadcast %81 : vector<1x4x8x16xf32> to vector<4x4x8x16xf32>
    %84 = arith.subf %82, %83 : vector<4x4x8x16xf32>
    %85 = arith.mulf %84, %84 : vector<4x4x8x16xf32>
    %cst_36 = arith.constant dense<0.000000e+00> : vector<4x4x16xf32>
    %86 = vector.multi_reduction <add>, %85, %cst_36 [2] : vector<4x4x8x16xf32> to vector<4x4x16xf32>
    %87 = vector.shape_cast %86 : vector<4x4x16xf32> to vector<16x16xf32>
    %cst_37 = arith.constant dense<0.000000e+00> : vector<16x2xf32>
    %88 = tpu.matmul %87, %2, %cst_37 {dimension_numbers = #tpu.dot_dimension_numbers<[1], [0], [0], [1], [0, 0, 1, 1], [], []>} : vector<16x16xf32>, vector<16x2xf32>, vector<16x2xf32> -> vector<16x2xf32>
    %89 = vector.shape_cast %88 : vector<16x2xf32> to vector<4x4x2xf32>
    %cst_38 = arith.constant 0.000000e+00 : f32
    %90 = vector.broadcast %cst_38 : f32 to vector<4x4x2xf32>
    %91 = arith.maximumf %89, %90 : vector<4x4x2xf32>
    %cst_39 = arith.constant -5.000000e-01 : f32
    %92 = vector.broadcast %cst_39 : f32 to vector<4x4x2xf32>
    %93 = arith.mulf %92, %91 : vector<4x4x2xf32>
    %cst_40 = arith.constant 1.000000e+00 : f32
    %94 = vector.broadcast %cst_40 : f32 to vector<4x4x2xf32>
    %95 = arith.divf %93, %94 : vector<4x4x2xf32>
    %96 = math.exp %95 : vector<4x4x2xf32>
    %cst_41 = arith.constant dense<0.000000e+00> : vector<4x2xf32>
    %97 = vector.multi_reduction <add>, %96, %cst_41 [1] : vector<4x4x2xf32> to vector<4x2xf32>
    %cst_42 = arith.constant 4.000000e+00 : f32
    %98 = vector.broadcast %cst_42 : f32 to vector<4x2xf32>
    %99 = arith.divf %97, %98 : vector<4x2xf32>
    %c3 = arith.constant 3 : index
    %c0_43 = arith.constant 0 : index
    %c0_44 = arith.constant 0 : index
    %100 = vector.load %arg4[%c3, %c0_43, %c0_44] : memref<4x4x4xf32, #tpu.memory_space<vmem>>, vector<1x4x4xf32>
    %101 = vector.shape_cast %100 : vector<1x4x4xf32> to vector<4x4xf32>
    %cst_45 = arith.constant dense<0.000000e+00> : vector<4x2xf32>
    %102 = tpu.matmul %101, %99, %cst_45 {dimension_numbers = #tpu.dot_dimension_numbers<[1], [0], [0], [1], [0, 0, 1, 1], [], []>} : vector<4x4xf32>, vector<4x2xf32>, vector<4x2xf32> -> vector<4x2xf32>
    %103 = arith.addf %78, %102 : vector<4x2xf32>
    %c0_46 = arith.constant 0 : index
    %c0_47 = arith.constant 0 : index
    %104 = vector.load %arg5[%c0_46, %c0_47] : memref<4x1xf32, #tpu.memory_space<vmem>>, vector<4x1xf32>
    %105 = vector.broadcast %104 : vector<4x1xf32> to vector<4x2xf32>
    %106 = arith.addf %103, %105 : vector<4x2xf32>
    %cst_48 = arith.constant 0.000000e+00 : f32
    %107 = vector.broadcast %cst_48 : f32 to vector<4x2xf32>
    %108 = arith.maximumf %106, %107 : vector<4x2xf32>
    %c0_49 = arith.constant 0 : index
    %c0_50 = arith.constant 0 : index
    %109 = vector.load %arg6[%c0_49, %c0_50] : memref<16x4xf32, #tpu.memory_space<vmem>>, vector<16x4xf32>
    %cst_51 = arith.constant dense<0.000000e+00> : vector<16x2xf32>
    %110 = tpu.matmul %109, %108, %cst_51 {dimension_numbers = #tpu.dot_dimension_numbers<[1], [0], [0], [1], [0, 0, 1, 1], [], []>} : vector<16x4xf32>, vector<4x2xf32>, vector<16x2xf32> -> vector<16x2xf32>
    %c0_52 = arith.constant 0 : index
    %c0_53 = arith.constant 0 : index
    %111 = vector.load %arg7[%c0_52, %c0_53] : memref<16x1xf32, #tpu.memory_space<vmem>>, vector<16x1xf32>
    %112 = vector.broadcast %111 : vector<16x1xf32> to vector<16x2xf32>
    %113 = arith.addf %110, %112 : vector<16x2xf32>
    %114 = arith.negf %113 : vector<16x2xf32>
    %115 = math.exp %114 : vector<16x2xf32>
    %cst_54 = arith.constant 1.000000e+00 : f32
    %116 = vector.broadcast %cst_54 : f32 to vector<16x2xf32>
    %117 = arith.addf %116, %115 : vector<16x2xf32>
    %118 = arith.divf %116, %117 : vector<16x2xf32>
    %cst_55 = arith.constant 5.000000e-01 : f32
    %119 = vector.broadcast %cst_55 : f32 to vector<16x2xf32>
    %120 = arith.addf %118, %119 : vector<16x2xf32>
    %c0_56 = arith.constant 0 : index
    %c0_57 = arith.constant 0 : index
    %c0_58 = arith.constant 0 : index
    %c0_59 = arith.constant 0 : index
    %121 = vector.load %arg8[%c0_56, %c0_57, %c0_58, %c0_59] : memref<1x1x16x2xf32, #tpu.memory_space<vmem>>, vector<1x1x16x2xf32>
    %122 = vector.shape_cast %121 : vector<1x1x16x2xf32> to vector<16x2xf32>
    %123 = vector.shape_cast %120 : vector<16x2xf32> to vector<1x1x16x2xf32>
    tpu.vector_store %arg8[%c0_56, %c0_57, %c0_58, %c0_59], %123 {strides = array<i32>} : memref<1x1x16x2xf32, #tpu.memory_space<vmem>>, vector<1x1x16x2xf32>,
    return
  }
  func.func @transform_0(%arg0: i32, %arg1: i32) -> (i32, i32, i32, i32) {
    %c0_i32 = arith.constant 0 : i32
    %c0_i32_0 = arith.constant 0 : i32
    %c0_i32_1 = arith.constant 0 : i32
    return %arg0, %c0_i32, %arg1, %c0_i32_0 : i32, i32, i32, i32
  }
  func.func @transform_1(%arg0: i32, %arg1: i32) -> (i32, i32) {
    %c0_i32 = arith.constant 0 : i32
    %c0_i32_0 = arith.constant 0 : i32
    %c0_i32_1 = arith.constant 0 : i32
    return %c0_i32, %c0_i32_0 : i32, i32
  }
  func.func @transform_2(%arg0: i32, %arg1: i32) -> (i32, i32, i32) {
    %c0_i32 = arith.constant 0 : i32
    %c0_i32_0 = arith.constant 0 : i32
    %c0_i32_1 = arith.constant 0 : i32
    %c0_i32_2 = arith.constant 0 : i32
    return %c0_i32, %c0_i32_0, %c0_i32_1 : i32, i32, i32
  }
  func.func @transform_3(%arg0: i32, %arg1: i32) -> (i32, i32) {
    %c0_i32 = arith.constant 0 : i32
    %c0_i32_0 = arith.constant 0 : i32
    %c0_i32_1 = arith.constant 0 : i32
    return %c0_i32, %c0_i32_0 : i32, i32
  }
  func.func @transform_4(%arg0: i32, %arg1: i32) -> (i32, i32) {
    %c0_i32 = arith.constant 0 : i32
    %c0_i32_0 = arith.constant 0 : i32
    %c0_i32_1 = arith.constant 0 : i32
    return %c0_i32, %c0_i32_0 : i32, i32
  }
  func.func @transform_5(%arg0: i32, %arg1: i32) -> (i32, i32) {
    %c0_i32 = arith.constant 0 : i32
    %c0_i32_0 = arith.constant 0 : i32
    %c0_i32_1 = arith.constant 0 : i32
    return %c0_i32, %c0_i32_0 : i32, i32
  }
  func.func @transform_6(%arg0: i32, %arg1: i32) -> (i32, i32, i32, i32) {
    %c0_i32 = arith.constant 0 : i32
    %c0_i32_0 = arith.constant 0 : i32
    %c0_i32_1 = arith.constant 0 : i32
    return %arg0, %arg1, %c0_i32, %c0_i32_0 : i32, i32, i32, i32
  }
}

</mosaic_0001>

<llo_original>
// kernel: tpu_custom_call.1
$region0: #{tpu_custom_call.1}
  #allocation0 [shape = 'u32[]', space=smem, size = 0x4, offset = 0x4, fixed_abs, tag = 'smem constant byte address 0x4 - core index']
  #allocation1 [shape = 'u32[144,128]{1,0:T(1,128)}', space=vmem, size = 0x12000, scoped, tag = 'internal scratch']
  %s0 = inlined_call_operand.hbm [shape: f32[2,16,16,16], index: 0, kind: input, shape index: {}]
  %s1 = inlined_call_operand.vmem [shape: f32[16,2], index: 1, kind: input, shape index: {}]
  %s2 = inlined_call_operand.vmem [shape: f32[4,4,4], index: 2, kind: input, shape index: {}]
  %s3 = inlined_call_operand.vmem [shape: f32[4,1], index: 3, kind: input, shape index: {}]
  %s4 = inlined_call_operand.vmem [shape: f32[16,4], index: 4, kind: input, shape index: {}]
  %s5 = inlined_call_operand.vmem [shape: f32[16,1], index: 5, kind: input, shape index: {}]
  %s6 = inlined_call_operand.vmem [shape: f32[2,2,16,2], index: 6, kind: output, shape index: {}]
  %s7 = sld [smem:[#allocation0]]
  $region61: #{tpu_custom_call.1} parent=0
    _
  %s9 = ssub.s32 1, %s7
  %s10 = scalar_select 0, %s9, %s7
  $region1: #{tpu_custom_call.1} parent=0
    #allocation2 [shape = 'u8[131072]{0}', space=vmem, size = 0x20000, scoped, tag = 'input window, operand 0']
    #allocation3 [shape = 's32[2]{0}', space=sflag, size = 0x8, scoped, tag = 'scoped memory for tpu_custom_call.1']
    %11 = vsyncpa [#allocation3], 0
    %s12 = scalar_lea.sflag [#allocation3], 1
    %13 = vsyncpa %s12, 0
    loop: start=0, step=1, limit=6
    $region2: #{tpu_custom_call.1} parent=1 // loop_pre_header
      _
    $region3: #{tpu_custom_call.1} parent=1 // loop_header
      %s15 = sphi 0, %s19
      %p16 = scmp.ge.s32.totalorder %s15, 6
      %s22 = sphi 0, %s34
      %s23 = sphi 0, %s30
      %s24 = sphi 0, %s22
      %s25 = sphi 0, %s23
      %s26 = sphi 0, %s24
      %s27 = sphi 0, %s25
      %s39 = sphi 0, %s41
      %s42 = sphi 0, %s39
      %s43 = sphi 0, %s42
      %s59 = sphi 0, %s43
      %s63 = sphi 0, %s63
      %s65 = sphi 0, %s63
      %s66 = sphi 0, %s65
      %s80 = sphi 0, %s66
      %s84 = sphi 0, %s84
      %s86 = sphi 0, %s84
      %s87 = sphi 0, %s86
      %s101 = sphi 0, %s87
      %s105 = sphi 0, %s105
      %s107 = sphi 0, %s105
      %s108 = sphi 0, %s107
      %s122 = sphi 0, %s108
      %s126 = sphi 0, %s126
      %s128 = sphi 0, %s126
      %s129 = sphi 0, %s128
      %s143 = sphi 0, %s129
      %s147 = sphi 0, %s147
      %s149 = sphi 0, %s147
      %s150 = sphi 0, %s149
      %s164 = sphi 0, %s150
      %s172 = sphi 0, %s174
      %s175 = sphi 0, %s172
      %s176 = sphi 0, %s175
      %s192 = sphi 0, %s176
    $region4: #{tpu_custom_call.1} parent=1 // loop_header_branch
      %18 = sbr.rel (%p16) target = $region8
    $region5: #{tpu_custom_call.1} parent=1 // loop_body
      %s20 = ssub.s32 %s15, 1
      %s21 = ssub.s32 %s15, 2
      %s28 = sadd.s32 1, %s23
      %p29 = scmp.ge.s32.totalorder %s28, 2
      %s30 = scalar_select %p29, 0, %s28
      %s31 = sadd.s32 1, %s22
      %s32 = scalar_select %p29, %s31, %s22
      %p33 = scmp.ge.s32.totalorder %s32, 2
      %s34 = scalar_select %p33, 0, %s32
      %s35 = ssub.s32 %s22, %s34
      %s36 = ssub.s32 %s23, %s30
      %s37 = sor.u32 %s35, %s36
      %p38 = scmp.eq.s32.totalorder %s37, 0
      %s40 = sadd.s32 %s39, 1
      %s41 = scalar_select %p38, %s39, %s40
      %p44 = pneg %p38
      %p45 = scmp.eq.s32.totalorder %s15, 3
      %p46 = por %p44, %p45
      %p47 = scmp.ne.s32.totalorder %s39, %s42
      %p48 = scmp.eq.s32.totalorder %s15, 0
      %p49 = por %p47, %p48
      %p50 = scmp.ne.s32.totalorder %s39, %s42
      %p51 = scmp.eq.s32.totalorder %s20, 3
      %p52 = por %p50, %p51
      %p53 = scmp.ne.s32.totalorder %s42, %s43
      %p54 = scmp.eq.s32.totalorder %s20, 0
      %p55 = por %p53, %p54
      %p56 = scmp.ne.s32.totalorder %s42, %s43
      %p57 = scmp.eq.s32.totalorder %s21, 3
      %p58 = por %p56, %p57
      %p60 = scmp.ne.s32.totalorder %s43, %s59
      %p61 = scmp.eq.s32.totalorder %s21, 0
      %p62 = por %p60, %p61
      %s64 = sadd.s32 %s63, 1
      %p67 = scmp.eq.s32.totalorder %s15, 3
      %p68 = scmp.ne.s32.totalorder %s63, %s65
      %p69 = scmp.eq.s32.totalorder %s15, 0
      %p70 = por %p68, %p69
      %p71 = scmp.ne.s32.totalorder %s63, %s65
      %p72 = scmp.eq.s32.totalorder %s20, 3
      %p73 = por %p71, %p72
      %p74 = scmp.ne.s32.totalorder %s65, %s66
      %p75 = scmp.eq.s32.totalorder %s20, 0
      %p76 = por %p74, %p75
      %p77 = scmp.ne.s32.totalorder %s65, %s66
      %p78 = scmp.eq.s32.totalorder %s21, 3
      %p79 = por %p77, %p78
      %p81 = scmp.ne.s32.totalorder %s66, %s80
      %p82 = scmp.eq.s32.totalorder %s21, 0
      %p83 = por %p81, %p82
      %s85 = sadd.s32 %s84, 1
      %p88 = scmp.eq.s32.totalorder %s15, 3
      %p89 = scmp.ne.s32.totalorder %s84, %s86
      %p90 = scmp.eq.s32.totalorder %s15, 0
      %p91 = por %p89, %p90
      %p92 = scmp.ne.s32.totalorder %s84, %s86
      %p93 = scmp.eq.s32.totalorder %s20, 3
      %p94 = por %p92, %p93
      %p95 = scmp.ne.s32.totalorder %s86, %s87
      %p96 = scmp.eq.s32.totalorder %s20, 0
      %p97 = por %p95, %p96
      %p98 = scmp.ne.s32.totalorder %s86, %s87
      %p99 = scmp.eq.s32.totalorder %s21, 3
      %p100 = por %p98, %p99
      %p102 = scmp.ne.s32.totalorder %s87, %s101
      %p103 = scmp.eq.s32.totalorder %s21, 0
      %p104 = por %p102, %p103
      %s106 = sadd.s32 %s105, 1
      %p109 = scmp.eq.s32.totalorder %s15, 3
      %p110 = scmp.ne.s32.totalorder %s105, %s107
      %p111 = scmp.eq.s32.totalorder %s15, 0
      %p112 = por %p110, %p111
      %p113 = scmp.ne.s32.totalorder %s105, %s107
      %p114 = scmp.eq.s32.totalorder %s20, 3
      %p115 = por %p113, %p114
      %p116 = scmp.ne.s32.totalorder %s107, %s108
      %p117 = scmp.eq.s32.totalorder %s20, 0
      %p118 = por %p116, %p117
      %p119 = scmp.ne.s32.totalorder %s107, %s108
      %p120 = scmp.eq.s32.totalorder %s21, 3
      %p121 = por %p119, %p120
      %p123 = scmp.ne.s32.totalorder %s108, %s122
      %p124 = scmp.eq.s32.totalorder %s21, 0
      %p125 = por %p123, %p124
      %s127 = sadd.s32 %s126, 1
      %p130 = scmp.eq.s32.totalorder %s15, 3
      %p131 = scmp.ne.s32.totalorder %s126, %s128
      %p132 = scmp.eq.s32.totalorder %s15, 0
      %p133 = por %p131, %p132
      %p134 = scmp.ne.s32.totalorder %s126, %s128
      %p135 = scmp.eq.s32.totalorder %s20, 3
      %p136 = por %p134, %p135
      %p137 = scmp.ne.s32.totalorder %s128, %s129
      %p138 = scmp.eq.s32.totalorder %s20, 0
      %p139 = por %p137, %p138
      %p140 = scmp.ne.s32.totalorder %s128, %s129
      %p141 = scmp.eq.s32.totalorder %s21, 3
      %p142 = por %p140, %p141
      %p144 = scmp.ne.s32.totalorder %s129, %s143
      %p145 = scmp.eq.s32.totalorder %s21, 0
      %p146 = por %p144, %p145
      %s148 = sadd.s32 %s147, 1
      %p151 = scmp.eq.s32.totalorder %s15, 3
      %p152 = scmp.ne.s32.totalorder %s147, %s149
      %p153 = scmp.eq.s32.totalorder %s15, 0
      %p154 = por %p152, %p153
      %p155 = scmp.ne.s32.totalorder %s147, %s149
      %p156 = scmp.eq.s32.totalorder %s20, 3
      %p157 = por %p155, %p156
      %p158 = scmp.ne.s32.totalorder %s149, %s150
      %p159 = scmp.eq.s32.totalorder %s20, 0
      %p160 = por %p158, %p159
      %p161 = scmp.ne.s32.totalorder %s149, %s150
      %p162 = scmp.eq.s32.totalorder %s21, 3
      %p163 = por %p161, %p162
      %p165 = scmp.ne.s32.totalorder %s150, %s164
      %p166 = scmp.eq.s32.totalorder %s21, 0
      %p167 = por %p165, %p166
      %s168 = ssub.s32 %s22, %s34
      %s169 = ssub.s32 %s23, %s30
      %s170 = sor.u32 %s168, %s169
      %p171 = scmp.eq.s32.totalorder %s170, 0
      %s173 = sadd.s32 %s172, 1
      %s174 = scalar_select %p171, %s172, %s173
      %p177 = pneg %p171
      %p178 = scmp.eq.s32.totalorder %s15, 3
      %p179 = por %p177, %p178
      %p180 = scmp.ne.s32.totalorder %s172, %s175
      %p181 = scmp.eq.s32.totalorder %s15, 0
      %p182 = por %p180, %p181
      %p183 = scmp.ne.s32.totalorder %s172, %s175
      %p184 = scmp.eq.s32.totalorder %s20, 3
      %p185 = por %p183, %p184
      %p186 = scmp.ne.s32.totalorder %s175, %s176
      %p187 = scmp.eq.s32.totalorder %s20, 0
      %p188 = por %p186, %p187
      %p189 = scmp.ne.s32.totalorder %s175, %s176
      %p190 = scmp.eq.s32.totalorder %s21, 3
      %p191 = por %p189, %p190
      %p193 = scmp.ne.s32.totalorder %s176, %s192
      %p194 = scmp.eq.s32.totalorder %s21, 0
      %p195 = por %p193, %p194
      %p196 = scmp.le.s32.totalorder 1, %s15
      %p197 = scmp.lt.s32.totalorder %s15, 5
      %p198 = pnand %p196, %p197
      %p199 = pneg %p198
      // Predicated region
      $region9: #{tpu_custom_call.1} parent=5 // pred_check
        _
      $region10: #{tpu_custom_call.1} parent=5 // pred_check_branch
        %201 = sbr.rel (%p198) target = $region12
      $region11: #{tpu_custom_call.1} parent=5 // pred_region
        %s202 = ssub.s32 %s15, 1
        // Predicated region
        $region13: #{tpu_custom_call.1} parent=11 // pred_check
          %p203 = pneg %p76
        $region14: #{tpu_custom_call.1} parent=11 // pred_check_branch
          %205 = sbr.rel (%p203) target = $region16
        $region15: #{tpu_custom_call.1} parent=11 // pred_region
          _
        $region16: #{tpu_custom_call.1} parent=11 // pred_fallthru
          _
        // Predicated region
        $region17: #{tpu_custom_call.1} parent=11 // pred_check
          %p206 = pneg %p97
        $region18: #{tpu_custom_call.1} parent=11 // pred_check_branch
          %208 = sbr.rel (%p206) target = $region20
        $region19: #{tpu_custom_call.1} parent=11 // pred_region
          _
        $region20: #{tpu_custom_call.1} parent=11 // pred_fallthru
          _
        // Predicated region
        $region21: #{tpu_custom_call.1} parent=11 // pred_check
          %p209 = pneg %p118
        $region22: #{tpu_custom_call.1} parent=11 // pred_check_branch
          %211 = sbr.rel (%p209) target = $region24
        $region23: #{tpu_custom_call.1} parent=11 // pred_region
          _
        $region24: #{tpu_custom_call.1} parent=11 // pred_fallthru
          _
        // Predicated region
        $region25: #{tpu_custom_call.1} parent=11 // pred_check
          %p212 = pneg %p139
        $region26: #{tpu_custom_call.1} parent=11 // pred_check_branch
          %214 = sbr.rel (%p212) target = $region28
        $region27: #{tpu_custom_call.1} parent=11 // pred_region
          _
        $region28: #{tpu_custom_call.1} parent=11 // pred_fallthru
          _
        // Predicated region
        $region29: #{tpu_custom_call.1} parent=11 // pred_check
          %p215 = pneg %p160
        $region30: #{tpu_custom_call.1} parent=11 // pred_check_branch
          %217 = sbr.rel (%p215) target = $region32
        $region31: #{tpu_custom_call.1} parent=11 // pred_region
          _
        $region32: #{tpu_custom_call.1} parent=11 // pred_fallthru
          _
      $region12: #{tpu_custom_call.1} parent=5 // pred_fallthru
        _
      %p218 = scmp.lt.s32.totalorder %s15, 4
      // Predicated region
      $region33: #{tpu_custom_call.1} parent=5 // pred_check
        %p219 = pneg %p218
      $region34: #{tpu_custom_call.1} parent=5 // pred_check_branch
        %221 = sbr.rel (%p219) target = $region36
      $region35: #{tpu_custom_call.1} parent=5 // pred_region
        // Predicated region
        $region37: #{tpu_custom_call.1} parent=35 // pred_check
          %p222 = pneg %p49
        $region38: #{tpu_custom_call.1} parent=35 // pred_check_branch
          %224 = sbr.rel (%p222) target = $region40
        $region39: #{tpu_custom_call.1} parent=35 // pred_region
          %s225 = sand.u32 %s39, 1
          %s226 = scalar_lea.sflag [#allocation3], %s225
          %s227 = sand.u32 %s39, 1
          %s228 = smul.addr %s227, 128
          %s229 = scalar_lea.vmem [#allocation2], %s228
          %s231 = ssub.s32 2048, 2048
          %232 = vsyncadd %s226, %s231
          %s233 = smul.addr %s22, 32
          %s234 = sadd.s32 %s23, %s233
          %s235 = smul.addr %s234, 128
          %s236 = scalar_lea.hbm %s0, %s235
          %s237 = sshll.u32 %s229, 4
          %s238 = int_to_ptr.vmem [resolvable:$true] %s237
          %243 = dma.hbm_to_vmem [thread:$0]  %s236, 2048, %s238, %s226, 256, 128, 8
        $region40: #{tpu_custom_call.1} parent=35 // pred_fallthru
          _
      $region36: #{tpu_custom_call.1} parent=5 // pred_fallthru
        _
      %p244 = scmp.le.s32.totalorder 1, %s15
      %p245 = scmp.lt.s32.totalorder %s15, 5
      %p246 = pnand %p244, %p245
      %p247 = pneg %p246
      // Predicated region
      $region41: #{tpu_custom_call.1} parent=5 // pred_check
        _
      $region42: #{tpu_custom_call.1} parent=5 // pred_check_branch
        %249 = sbr.rel (%p246) target = $region44
      $region43: #{tpu_custom_call.1} parent=5 // pred_region
        %s250 = ssub.s32 %s15, 1
        %s251 = sand.u32 %s42, 1
        %s252 = scalar_lea.sflag [#allocation3], %s251
        %s253 = sand.u32 %s42, 1
        %s254 = smul.addr %s253, 128
        %s255 = scalar_lea.vmem [#allocation2], %s254
        // Predicated region
        $region45: #{tpu_custom_call.1} parent=43 // pred_check
          %p256 = pneg %p55
        $region46: #{tpu_custom_call.1} parent=43 // pred_check_branch
          %258 = sbr.rel (%p256) target = $region48
        $region47: #{tpu_custom_call.1} parent=43 // pred_region
          %259 = dma.done %s252, 2048
        $region48: #{tpu_custom_call.1} parent=43 // pred_fallthru
          _
        %s260 = sand.u32 %s42, 1
        %s261 = scalar_lea.sflag [#allocation3], %s260
        %s262 = sand.u32 %s42, 1
        %s263 = smul.addr %s262, 128
        %s264 = scalar_lea.vmem [#allocation2], %s263
        %p265 = pneg %p55
        %p266 = pneg %p52
        %p267 = pneg %p76
        %p268 = pneg %p73
        %p269 = pneg %p97
        %p270 = pneg %p94
        %p271 = pneg %p118
        %p272 = pneg %p115
        %p273 = pneg %p139
        %p274 = pneg %p136
        %p275 = pneg %p160
        %p276 = pneg %p157
        %p277 = pneg %p188
        %p278 = pneg %p185
        %p279 = scmp.lt.s32.totalorder %s24, 1
        %s280 = scalar_select %p279, %s24, 1
        %p281 = scmp.lt.s32.totalorder %s25, 1
        %s282 = scalar_select %p281, %s25, 1
        %s283 = smul.addr %s282, 2
        %s284 = smul.addr %s280, 4
        %s285 = sadd.s32 %s283, %s284
        %s286 = smul.addr %s285, 8
        %s287 = scalar_lea.vmem %s6, %s286
        %p288 = scmp.lt.s32.totalorder %s24, 1
        %s289 = scalar_select %p288, %s24, 1
        %p290 = scmp.lt.s32.totalorder %s25, 1
        %s291 = scalar_select %p290, %s25, 1
        %s292 = smul.addr %s291, 2
        %s293 = smul.addr %s289, 4
        %s294 = sadd.s32 %s292, %s293
        %s295 = smul.addr %s294, 8
        %s296 = scalar_lea.vmem %s6, %s295
        %v297 = vld [vmem:[%s255] sm:$0xff]
        %v298 = vld [vmem:[%s255 + $0x8] sm:$0xff]
        %v299 = vld [vmem:[%s255 + $0x10] sm:$0xff]
        %v300 = vld [vmem:[%s255 + $0x18] sm:$0xff]
        %v301 = vld [vmem:[%s255 + $0x20] sm:$0xff]
        %v302 = vld [vmem:[%s255 + $0x28] sm:$0xff]
        %v303 = vld [vmem:[%s255 + $0x30] sm:$0xff]
        %v304 = vld [vmem:[%s255 + $0x38] sm:$0xff]
        %v305 = vld [vmem:[%s255 + $0x40] sm:$0xff]
        %v306 = vld [vmem:[%s255 + $0x48] sm:$0xff]
        %v307 = vld [vmem:[%s255 + $0x50] sm:$0xff]
        %v308 = vld [vmem:[%s255 + $0x58] sm:$0xff]
        %v309 = vld [vmem:[%s255 + $0x60] sm:$0xff]
        %v310 = vld [vmem:[%s255 + $0x68] sm:$0xff]
        %v311 = vld [vmem:[%s255 + $0x70] sm:$0xff]
        %v312 = vld [vmem:[%s255 + $0x78] sm:$0xff]
        %v313 = vld [vmem:[%s1] sm:$0xff]
        %v314 = vld [vmem:[%s1 + $0x8] sm:$0xff]
        %v315 = vsub.f32 %v297, %v297
        %v316 = vsub.f32 %v297, %v298
        %v317 = vsub.f32 %v297, %v299
        %v318 = vsub.f32 %v297, %v300
        %v319 = vsub.f32 %v298, %v297
        %v320 = vsub.f32 %v298, %v298
        %v321 = vsub.f32 %v298, %v299
        %v322 = vsub.f32 %v298, %v300
        %v323 = vsub.f32 %v299, %v297
        %v324 = vsub.f32 %v299, %v298
        %v325 = vsub.f32 %v299, %v299
        %v326 = vsub.f32 %v299, %v300
        %v327 = vsub.f32 %v300, %v297
        %v328 = vsub.f32 %v300, %v298
        %v329 = vsub.f32 %v300, %v299
        %v330 = vsub.f32 %v300, %v300
        %v331 = vmul.f32 %v315, %v315
        %v332 = vmul.f32 %v316, %v316
        %v333 = vmul.f32 %v317, %v317
        %v334 = vmul.f32 %v318, %v318
        %v335 = vmul.f32 %v319, %v319
        %v336 = vmul.f32 %v320, %v320
        %v337 = vmul.f32 %v321, %v321
        %v338 = vmul.f32 %v322, %v322
        %v339 = vmul.f32 %v323, %v323
        %v340 = vmul.f32 %v324, %v324
        %v341 = vmul.f32 %v325, %v325
        %v342 = vmul.f32 %v326, %v326
        %v343 = vmul.f32 %v327, %v327
        %v344 = vmul.f32 %v328, %v328
        %v345 = vmul.f32 %v329, %v329
        %v346 = vmul.f32 %v330, %v330
        %vm347 = vcmask 130048
        %v348 = vsel %vm347, %v331, 0.0
        %v349 = vrot.slane %v348, 4
        %v350 = vadd.f32 %v348, %v349
        %v351 = vrot.slane %v350, 2
        %v352 = vadd.f32 %v350, %v351
        %v353 = vrot.slane %v352, 1
        %v354 = vadd.f32 %v352, %v353
        %v355 = vsel %vm347, %v332, 0.0
        %v356 = vrot.slane %v355, 4
        %v357 = vadd.f32 %v355, %v356
        %v358 = vrot.slane %v357, 2
        %v359 = vadd.f32 %v357, %v358
        %v360 = vrot.slane %v359, 1
        %v361 = vadd.f32 %v359, %v360
        %v362 = vsel %vm347, %v333, 0.0
        %v363 = vrot.slane %v362, 4
        %v364 = vadd.f32 %v362, %v363
        %v365 = vrot.slane %v364, 2
        %v366 = vadd.f32 %v364, %v365
        %v367 = vrot.slane %v366, 1
        %v368 = vadd.f32 %v366, %v367
        %v369 = vsel %vm347, %v334, 0.0
        %v370 = vrot.slane %v369, 4
        %v371 = vadd.f32 %v369, %v370
        %v372 = vrot.slane %v371, 2
        %v373 = vadd.f32 %v371, %v372
        %v374 = vrot.slane %v373, 1
        %v375 = vadd.f32 %v373, %v374
        %v376 = vsel %vm347, %v335, 0.0
        %v377 = vrot.slane %v376, 4
        %v378 = vadd.f32 %v376, %v377
        %v379 = vrot.slane %v378, 2
        %v380 = vadd.f32 %v378, %v379
        %v381 = vrot.slane %v380, 1
        %v382 = vadd.f32 %v380, %v381
        %v383 = vsel %vm347, %v336, 0.0
        %v384 = vrot.slane %v383, 4
        %v385 = vadd.f32 %v383, %v384
        %v386 = vrot.slane %v385, 2
        %v387 = vadd.f32 %v385, %v386
        %v388 = vrot.slane %v387, 1
        %v389 = vadd.f32 %v387, %v388
        %v390 = vsel %vm347, %v337, 0.0
        %v391 = vrot.slane %v390, 4
        %v392 = vadd.f32 %v390, %v391
        %v393 = vrot.slane %v392, 2
        %v394 = vadd.f32 %v392, %v393
        %v395 = vrot.slane %v394, 1
        %v396 = vadd.f32 %v394, %v395
        %v397 = vsel %vm347, %v338, 0.0
        %v398 = vrot.slane %v397, 4
        %v399 = vadd.f32 %v397, %v398
        %v400 = vrot.slane %v399, 2
        %v401 = vadd.f32 %v399, %v400
        %v402 = vrot.slane %v401, 1
        %v403 = vadd.f32 %v401, %v402
        %v404 = vsel %vm347, %v339, 0.0
        %v405 = vrot.slane %v404, 4
        %v406 = vadd.f32 %v404, %v405
        %v407 = vrot.slane %v406, 2
        %v408 = vadd.f32 %v406, %v407
        %v409 = vrot.slane %v408, 1
        %v410 = vadd.f32 %v408, %v409
        %v411 = vsel %vm347, %v340, 0.0
        %v412 = vrot.slane %v411, 4
        %v413 = vadd.f32 %v411, %v412
        %v414 = vrot.slane %v413, 2
        %v415 = vadd.f32 %v413, %v414
        %v416 = vrot.slane %v415, 1
        %v417 = vadd.f32 %v415, %v416
        %v418 = vsel %vm347, %v341, 0.0
        %v419 = vrot.slane %v418, 4
        %v420 = vadd.f32 %v418, %v419
        %v421 = vrot.slane %v420, 2
        %v422 = vadd.f32 %v420, %v421
        %v423 = vrot.slane %v422, 1
        %v424 = vadd.f32 %v422, %v423
        %v425 = vsel %vm347, %v342, 0.0
        %v426 = vrot.slane %v425, 4
        %v427 = vadd.f32 %v425, %v426
        %v428 = vrot.slane %v427, 2
        %v429 = vadd.f32 %v427, %v428
        %v430 = vrot.slane %v429, 1
        %v431 = vadd.f32 %v429, %v430
        %v432 = vsel %vm347, %v343, 0.0
        %v433 = vrot.slane %v432, 4
        %v434 = vadd.f32 %v432, %v433
        %v435 = vrot.slane %v434, 2
        %v436 = vadd.f32 %v434, %v435
        %v437 = vrot.slane %v436, 1
        %v438 = vadd.f32 %v436, %v437
        %v439 = vsel %vm347, %v344, 0.0
        %v440 = vrot.slane %v439, 4
        %v441 = vadd.f32 %v439, %v440
        %v442 = vrot.slane %v441, 2
        %v443 = vadd.f32 %v441, %v442
        %v444 = vrot.slane %v443, 1
        %v445 = vadd.f32 %v443, %v444
        %v446 = vsel %vm347, %v345, 0.0
        %v447 = vrot.slane %v446, 4
        %v448 = vadd.f32 %v446, %v447
        %v449 = vrot.slane %v448, 2
        %v450 = vadd.f32 %v448, %v449
        %v451 = vrot.slane %v450, 1
        %v452 = vadd.f32 %v450, %v451
        %v453 = vsel %vm347, %v346, 0.0
        %v454 = vrot.slane %v453, 4
        %v455 = vadd.f32 %v453, %v454
        %v456 = vrot.slane %v455, 2
        %v457 = vadd.f32 %v455, %v456
        %v458 = vrot.slane %v457, 1
        %v459 = vadd.f32 %v457, %v458
        %vm476 = vcmask 1041409
        %v477 = vsel %vm476, %v361, %v354
        %vm478 = vcmask 1042434
        %v479 = vsel %vm478, %v368, %v477
        %vm480 = vcmask 1043459
        %v481 = vsel %vm480, %v375, %v479
        %vm482 = vcmask 1044484
        %v483 = vsel %vm482, %v382, %v481
        %vm484 = vcmask 1045509
        %v485 = vsel %vm484, %v389, %v483
        %vm486 = vcmask 1046534
        %v487 = vsel %vm486, %v396, %v485
        %vm488 = vcmask 1047559
        %v489 = vsel %vm488, %v403, %v487
        %v490 = vsel %vm476, %v417, %v410
        %v491 = vsel %vm478, %v424, %v490
        %v492 = vsel %vm480, %v431, %v491
        %v493 = vsel %vm482, %v438, %v492
        %v494 = vsel %vm484, %v445, %v493
        %v495 = vsel %vm486, %v452, %v494
        %v496 = vsel %vm488, %v459, %v495
        %v497 = vsel %vm347, %v489, 0
        %v499 = vsel %vm347, %v496, 0
        %501 = vmatprep.subr.mxu0 0.0
        %502 = vmatpush1.msra.mxu0 %v313
        %503 = vmatprep.subr.mxu0 0.0
        %504 = vmatpush1.msra.mxu0 %v314
        %505 = vmatprep.subr.mxu0 0.0
        %506 = vmatpush1.msra.mxu0 0.0
        %507 = vmatprep.subr.mxu0 0.0
        %508 = vmatpush1.msra.mxu0 0.0
        %509 = vmatprep.subr.mxu0 0.0
        %510 = vmatpush1.msra.mxu0 0.0
        %511 = vmatprep.subr.mxu0 0.0
        %512 = vmatpush1.msra.mxu0 0.0
        %513 = vmatprep.subr.mxu0 0.0
        %514 = vmatpush1.msra.mxu0 0.0
        %515 = vmatprep.subr.mxu0 0.0
        %516 = vmatpush1.msra.mxu0 0.0
        %517 = vmatprep.subr.mxu0 0.0
        %518 = vmatpush1.msra.mxu0 0.0
        %519 = vmatprep.subr.mxu0 0.0
        %520 = vmatpush1.msra.mxu0 0.0
        %521 = vmatprep.subr.mxu0 0.0
        %522 = vmatpush1.msra.mxu0 0.0
        %523 = vmatprep.subr.mxu0 0.0
        %524 = vmatpush1.msra.mxu0 0.0
        %525 = vmatprep.subr.mxu0 0.0
        %526 = vmatpush1.msra.mxu0 0.0
        %527 = vmatprep.subr.mxu0 0.0
        %528 = vmatpush1.msra.mxu0 0.0
        %529 = vmatprep.subr.mxu0 0.0
        %530 = vmatpush1.msra.mxu0 0.0
        %531 = vmatprep.subr.mxu0 0.0
        %532 = vmatpush1.msra.mxu0 0.0
        %533 = vmatprep.subr.mxu0 0.0
        %534 = vmatpush1.msra.mxu0 0.0
        %535 = vmatprep.subr.mxu0 0.0
        %536 = vmatpush1.msra.mxu0 0.0
        %537 = vmatprep.subr.mxu0 0.0
        %538 = vmatpush1.msra.mxu0 0.0
        %539 = vmatprep.subr.mxu0 0.0
        %540 = vmatpush1.msra.mxu0 0.0
        %541 = vmatprep.subr.mxu0 0.0
        %542 = vmatpush1.msra.mxu0 0.0
        %543 = vmatprep.subr.mxu0 0.0
        %544 = vmatpush1.msra.mxu0 0.0
        %545 = vmatprep.subr.mxu0 0.0
        %546 = vmatpush1.msra.mxu0 0.0
        %547 = vmatprep.subr.mxu0 0.0
        %548 = vmatpush1.msra.mxu0 0.0
        %549 = vmatprep.subr.mxu0 0.0
        %550 = vmatpush1.msra.mxu0 0.0
        %551 = vmatprep.subr.mxu0 0.0
        %552 = vmatpush1.msra.mxu0 0.0
        %553 = vmatprep.subr.mxu0 0.0
        %554 = vmatpush1.msra.mxu0 0.0
        %555 = vmatprep.subr.mxu0 0.0
        %556 = vmatpush1.msra.mxu0 0.0
        %557 = vmatprep.subr.mxu0 0.0
        %558 = vmatpush1.msra.mxu0 0.0
        %559 = vmatprep.subr.mxu0 0.0
        %560 = vmatpush1.msra.mxu0 0.0
        %561 = vmatprep.subr.mxu0 0.0
        %562 = vmatpush1.msra.mxu0 0.0
        %563 = vmatprep.subr.mxu0 0.0
        %564 = vmatpush1.msra.mxu0 0.0
        %565 = vmatprep.mubr.f32.mxu0 0.0
        %566 = vmatmul.mubr.f32.gmra.mrb[0].mxu0 %v497
        %v567 = vpop.f32.mrb[0].mxu0
        %v568 = vadd.f32 0.0, %v567
        %v569 = vpop.f32.mrb[0].mxu0
        %570 = vmatprep.mubr.f32.mxu0 0.0
        %571 = vmatmul.mubr.f32.gmra.mrb[0].mxu0 %v499
        %v572 = vpop.f32.mrb[0].mxu0
        %v573 = vadd.f32 0.0, %v572
        %v574 = vpop.f32.mrb[0].mxu0
        %575 = vdwg.mxu0
        %v578 = vcombine.high %v568, %v568
        %v579 = vcombine.high %v573, %v573
        %v582 = vmax.f32 %v568, 0.0
        %v583 = vmax.f32 %v578, 0.0
        %v584 = vmax.f32 %v573, 0.0
        %v585 = vmax.f32 %v579, 0.0
        %v586 = vmul.f32 %v582, -0.5
        %v587 = vmul.f32 %v583, -0.5
        %v588 = vmul.f32 %v584, -0.5
        %v589 = vmul.f32 %v585, -0.5
        %v590 = vmul.f32 %v586, 1.442695
        %v591 = vpow.pop %v590
        %v592 = vmul.f32 %v587, 1.442695
        %v593 = vpow.pop %v592
        %v594 = vmul.f32 %v588, 1.442695
        %v595 = vpow.pop %v594
        %v596 = vmul.f32 %v589, 1.442695
        %v597 = vpow.pop %v596
        %vm598 = vcmask 11264
        %v599 = vsel %vm598, %v591, 0.0
        %v600 = vrot.slane %v599, 4
        %v601 = vadd.f32 %v599, %v600
        %v602 = vrot.slane %v601, 2
        %v603 = vadd.f32 %v601, %v602
        %v604 = vrot.slane %v603, 1
        %v605 = vadd.f32 %v603, %v604
        %v606 = vsel %vm598, %v593, 0.0
        %v607 = vrot.slane %v606, 4
        %v608 = vadd.f32 %v606, %v607
        %v609 = vrot.slane %v608, 2
        %v610 = vadd.f32 %v608, %v609
        %v611 = vrot.slane %v610, 1
        %v612 = vadd.f32 %v610, %v611
        %v613 = vsel %vm598, %v595, 0.0
        %v614 = vrot.slane %v613, 4
        %v615 = vadd.f32 %v613, %v614
        %v616 = vrot.slane %v615, 2
        %v617 = vadd.f32 %v615, %v616
        %v618 = vrot.slane %v617, 1
        %v619 = vadd.f32 %v617, %v618
        %v620 = vsel %vm598, %v597, 0.0
        %v621 = vrot.slane %v620, 4
        %v622 = vadd.f32 %v620, %v621
        %v623 = vrot.slane %v622, 2
        %v624 = vadd.f32 %v622, %v623
        %v625 = vrot.slane %v624, 1
        %v626 = vadd.f32 %v624, %v625
        %v627 = vrcp.pop 4.0
        %v628 = vmul.f32 %v605, %v627
        %v629 = vmul.f32 %v612, %v627
        %v630 = vmul.f32 %v619, %v627
        %v631 = vmul.f32 %v626, %v627
        %v632 = vld [vmem:[%s2] sm:$0xf]
        %v633 = vsub.f32 %v301, %v301
        %v634 = vsub.f32 %v301, %v302
        %v635 = vsub.f32 %v301, %v303
        %v636 = vsub.f32 %v301, %v304
        %v637 = vsub.f32 %v302, %v301
        %v638 = vsub.f32 %v302, %v302
        %v639 = vsub.f32 %v302, %v303
        %v640 = vsub.f32 %v302, %v304
        %v641 = vsub.f32 %v303, %v301
        %v642 = vsub.f32 %v303, %v302
        %v643 = vsub.f32 %v303, %v303
        %v644 = vsub.f32 %v303, %v304
        %v645 = vsub.f32 %v304, %v301
        %v646 = vsub.f32 %v304, %v302
        %v647 = vsub.f32 %v304, %v303
        %v648 = vsub.f32 %v304, %v304
        %v649 = vmul.f32 %v633, %v633
        %v650 = vmul.f32 %v634, %v634
        %v651 = vmul.f32 %v635, %v635
        %v652 = vmul.f32 %v636, %v636
        %v653 = vmul.f32 %v637, %v637
        %v654 = vmul.f32 %v638, %v638
        %v655 = vmul.f32 %v639, %v639
        %v656 = vmul.f32 %v640, %v640
        %v657 = vmul.f32 %v641, %v641
        %v658 = vmul.f32 %v642, %v642
        %v659 = vmul.f32 %v643, %v643
        %v660 = vmul.f32 %v644, %v644
        %v661 = vmul.f32 %v645, %v645
        %v662 = vmul.f32 %v646, %v646
        %v663 = vmul.f32 %v647, %v647
        %v664 = vmul.f32 %v648, %v648
        %v665 = vsel %vm347, %v649, 0.0
        %v666 = vrot.slane %v665, 4
        %v667 = vadd.f32 %v665, %v666
        %v668 = vrot.slane %v667, 2
        %v669 = vadd.f32 %v667, %v668
        %v670 = vrot.slane %v669, 1
        %v671 = vadd.f32 %v669, %v670
        %v672 = vsel %vm347, %v650, 0.0
        %v673 = vrot.slane %v672, 4
        %v674 = vadd.f32 %v672, %v673
        %v675 = vrot.slane %v674, 2
        %v676 = vadd.f32 %v674, %v675
        %v677 = vrot.slane %v676, 1
        %v678 = vadd.f32 %v676, %v677
        %v679 = vsel %vm347, %v651, 0.0
        %v680 = vrot.slane %v679, 4
        %v681 = vadd.f32 %v679, %v680
        %v682 = vrot.slane %v681, 2
        %v683 = vadd.f32 %v681, %v682
        %v684 = vrot.slane %v683, 1
        %v685 = vadd.f32 %v683, %v684
        %v686 = vsel %vm347, %v652, 0.0
        %v687 = vrot.slane %v686, 4
        %v688 = vadd.f32 %v686, %v687
        %v689 = vrot.slane %v688, 2
        %v690 = vadd.f32 %v688, %v689
        %v691 = vrot.slane %v690, 1
        %v692 = vadd.f32 %v690, %v691
        %v693 = vsel %vm347, %v653, 0.0
        %v694 = vrot.slane %v693, 4
        %v695 = vadd.f32 %v693, %v694
        %v696 = vrot.slane %v695, 2
        %v697 = vadd.f32 %v695, %v696
        %v698 = vrot.slane %v697, 1
        %v699 = vadd.f32 %v697, %v698
        %v700 = vsel %vm347, %v654, 0.0
        %v701 = vrot.slane %v700, 4
        %v702 = vadd.f32 %v700, %v701
        %v703 = vrot.slane %v702, 2
        %v704 = vadd.f32 %v702, %v703
        %v705 = vrot.slane %v704, 1
        %v706 = vadd.f32 %v704, %v705
        %v707 = vsel %vm347, %v655, 0.0
        %v708 = vrot.slane %v707, 4
        %v709 = vadd.f32 %v707, %v708
        %v710 = vrot.slane %v709, 2
        %v711 = vadd.f32 %v709, %v710
        %v712 = vrot.slane %v711, 1
        %v713 = vadd.f32 %v711, %v712
        %v714 = vsel %vm347, %v656, 0.0
        %v715 = vrot.slane %v714, 4
        %v716 = vadd.f32 %v714, %v715
        %v717 = vrot.slane %v716, 2
        %v718 = vadd.f32 %v716, %v717
        %v719 = vrot.slane %v718, 1
        %v720 = vadd.f32 %v718, %v719
        %v721 = vsel %vm347, %v657, 0.0
        %v722 = vrot.slane %v721, 4
        %v723 = vadd.f32 %v721, %v722
        %v724 = vrot.slane %v723, 2
        %v725 = vadd.f32 %v723, %v724
        %v726 = vrot.slane %v725, 1
        %v727 = vadd.f32 %v725, %v726
        %v728 = vsel %vm347, %v658, 0.0
        %v729 = vrot.slane %v728, 4
        %v730 = vadd.f32 %v728, %v729
        %v731 = vrot.slane %v730, 2
        %v732 = vadd.f32 %v730, %v731
        %v733 = vrot.slane %v732, 1
        %v734 = vadd.f32 %v732, %v733
        %v735 = vsel %vm347, %v659, 0.0
        %v736 = vrot.slane %v735, 4
        %v737 = vadd.f32 %v735, %v736
        %v738 = vrot.slane %v737, 2
        %v739 = vadd.f32 %v737, %v738
        %v740 = vrot.slane %v739, 1
        %v741 = vadd.f32 %v739, %v740
        %v742 = vsel %vm347, %v660, 0.0
        %v743 = vrot.slane %v742, 4
        %v744 = vadd.f32 %v742, %v743
        %v745 = vrot.slane %v744, 2
        %v746 = vadd.f32 %v744, %v745
        %v747 = vrot.slane %v746, 1
        %v748 = vadd.f32 %v746, %v747
        %v749 = vsel %vm347, %v661, 0.0
        %v750 = vrot.slane %v749, 4
        %v751 = vadd.f32 %v749, %v750
        %v752 = vrot.slane %v751, 2
        %v753 = vadd.f32 %v751, %v752
        %v754 = vrot.slane %v753, 1
        %v755 = vadd.f32 %v753, %v754
        %v756 = vsel %vm347, %v662, 0.0
        %v757 = vrot.slane %v756, 4
        %v758 = vadd.f32 %v756, %v757
        %v759 = vrot.slane %v758, 2
        %v760 = vadd.f32 %v758, %v759
        %v761 = vrot.slane %v760, 1
        %v762 = vadd.f32 %v760, %v761
        %v763 = vsel %vm347, %v663, 0.0
        %v764 = vrot.slane %v763, 4
        %v765 = vadd.f32 %v763, %v764
        %v766 = vrot.slane %v765, 2
        %v767 = vadd.f32 %v765, %v766
        %v768 = vrot.slane %v767, 1
        %v769 = vadd.f32 %v767, %v768
        %v770 = vsel %vm347, %v664, 0.0
        %v771 = vrot.slane %v770, 4
        %v772 = vadd.f32 %v770, %v771
        %v773 = vrot.slane %v772, 2
        %v774 = vadd.f32 %v772, %v773
        %v775 = vrot.slane %v774, 1
        %v776 = vadd.f32 %v774, %v775
        %v793 = vsel %vm476, %v678, %v671
        %v794 = vsel %vm478, %v685, %v793
        %v795 = vsel %vm480, %v692, %v794
        %v796 = vsel %vm482, %v699, %v795
        %v797 = vsel %vm484, %v706, %v796
        %v798 = vsel %vm486, %v713, %v797
        %v799 = vsel %vm488, %v720, %v798
        %v800 = vsel %vm476, %v734, %v727
        %v801 = vsel %vm478, %v741, %v800
        %v802 = vsel %vm480, %v748, %v801
        %v803 = vsel %vm482, %v755, %v802
        %v804 = vsel %vm484, %v762, %v803
        %v805 = vsel %vm486, %v769, %v804
        %v806 = vsel %vm488, %v776, %v805
        %v807 = vsel %vm347, %v799, 0
        %v809 = vsel %vm347, %v806, 0
        %811 = vmatprep.subr.mxu0 0.0
        %812 = vmatpush1.msra.mxu0 %v313
        %813 = vmatprep.subr.mxu0 0.0
        %814 = vmatpush1.msra.mxu0 %v314
        %815 = vmatprep.subr.mxu0 0.0
        %816 = vmatpush1.msra.mxu0 0.0
        %817 = vmatprep.subr.mxu0 0.0
        %818 = vmatpush1.msra.mxu0 0.0
        %819 = vmatprep.subr.mxu0 0.0
        %820 = vmatpush1.msra.mxu0 0.0
        %821 = vmatprep.subr.mxu0 0.0
        %822 = vmatpush1.msra.mxu0 0.0
        %823 = vmatprep.subr.mxu0 0.0
        %824 = vmatpush1.msra.mxu0 0.0
        %825 = vmatprep.subr.mxu0 0.0
        %826 = vmatpush1.msra.mxu0 0.0
        %827 = vmatprep.subr.mxu0 0.0
        %828 = vmatpush1.msra.mxu0 0.0
        %829 = vmatprep.subr.mxu0 0.0
        %830 = vmatpush1.msra.mxu0 0.0
        %831 = vmatprep.subr.mxu0 0.0
        %832 = vmatpush1.msra.mxu0 0.0
        %833 = vmatprep.subr.mxu0 0.0
        %834 = vmatpush1.msra.mxu0 0.0
        %835 = vmatprep.subr.mxu0 0.0
        %836 = vmatpush1.msra.mxu0 0.0
        %837 = vmatprep.subr.mxu0 0.0
        %838 = vmatpush1.msra.mxu0 0.0
        %839 = vmatprep.subr.mxu0 0.0
        %840 = vmatpush1.msra.mxu0 0.0
        %841 = vmatprep.subr.mxu0 0.0
        %842 = vmatpush1.msra.mxu0 0.0
        %843 = vmatprep.subr.mxu0 0.0
        %844 = vmatpush1.msra.mxu0 0.0
        %845 = vmatprep.subr.mxu0 0.0
        %846 = vmatpush1.msra.mxu0 0.0
        %847 = vmatprep.subr.mxu0 0.0
        %848 = vmatpush1.msra.mxu0 0.0
        %849 = vmatprep.subr.mxu0 0.0
        %850 = vmatpush1.msra.mxu0 0.0
        %851 = vmatprep.subr.mxu0 0.0
        %852 = vmatpush1.msra.mxu0 0.0
        %853 = vmatprep.subr.mxu0 0.0
        %854 = vmatpush1.msra.mxu0 0.0
        %855 = vmatprep.subr.mxu0 0.0
        %856 = vmatpush1.msra.mxu0 0.0
        %857 = vmatprep.subr.mxu0 0.0
        %858 = vmatpush1.msra.mxu0 0.0
        %859 = vmatprep.subr.mxu0 0.0
        %860 = vmatpush1.msra.mxu0 0.0
        %861 = vmatprep.subr.mxu0 0.0
        %862 = vmatpush1.msra.mxu0 0.0
        %863 = vmatprep.subr.mxu0 0.0
        %864 = vmatpush1.msra.mxu0 0.0
        %865 = vmatprep.subr.mxu0 0.0
        %866 = vmatpush1.msra.mxu0 0.0
        %867 = vmatprep.subr.mxu0 0.0
        %868 = vmatpush1.msra.mxu0 0.0
        %869 = vmatprep.subr.mxu0 0.0
        %870 = vmatpush1.msra.mxu0 0.0
        %871 = vmatprep.subr.mxu0 0.0
        %872 = vmatpush1.msra.mxu0 0.0
        %873 = vmatprep.subr.mxu0 0.0
        %874 = vmatpush1.msra.mxu0 0.0
        %875 = vmatprep.mubr.f32.mxu0 0.0
        %876 = vmatmul.mubr.f32.gmra.mrb[0].mxu0 %v807
        %v877 = vpop.f32.mrb[0].mxu0
        %v878 = vadd.f32 0.0, %v877
        %v879 = vpop.f32.mrb[0].mxu0
        %880 = vmatprep.mubr.f32.mxu0 0.0
        %881 = vmatmul.mubr.f32.gmra.mrb[0].mxu0 %v809
        %v882 = vpop.f32.mrb[0].mxu0
        %v883 = vadd.f32 0.0, %v882
        %v884 = vpop.f32.mrb[0].mxu0
        %885 = vdwg.mxu0
        %v888 = vcombine.high %v878, %v878
        %v889 = vcombine.high %v883, %v883
        %v892 = vmax.f32 %v878, 0.0
        %v893 = vmax.f32 %v888, 0.0
        %v894 = vmax.f32 %v883, 0.0
        %v895 = vmax.f32 %v889, 0.0
        %v896 = vmul.f32 %v892, -0.5
        %v897 = vmul.f32 %v893, -0.5
        %v898 = vmul.f32 %v894, -0.5
        %v899 = vmul.f32 %v895, -0.5
        %v900 = vmul.f32 %v896, 1.442695
        %v901 = vpow.pop %v900
        %v902 = vmul.f32 %v897, 1.442695
        %v903 = vpow.pop %v902
        %v904 = vmul.f32 %v898, 1.442695
        %v905 = vpow.pop %v904
        %v906 = vmul.f32 %v899, 1.442695
        %v907 = vpow.pop %v906
        %v908 = vsel %vm598, %v901, 0.0
        %v909 = vrot.slane %v908, 4
        %v910 = vadd.f32 %v908, %v909
        %v911 = vrot.slane %v910, 2
        %v912 = vadd.f32 %v910, %v911
        %v913 = vrot.slane %v912, 1
        %v914 = vadd.f32 %v912, %v913
        %v915 = vsel %vm598, %v903, 0.0
        %v916 = vrot.slane %v915, 4
        %v917 = vadd.f32 %v915, %v916
        %v918 = vrot.slane %v917, 2
        %v919 = vadd.f32 %v917, %v918
        %v920 = vrot.slane %v919, 1
        %v921 = vadd.f32 %v919, %v920
        %v922 = vsel %vm598, %v905, 0.0
        %v923 = vrot.slane %v922, 4
        %v924 = vadd.f32 %v922, %v923
        %v925 = vrot.slane %v924, 2
        %v926 = vadd.f32 %v924, %v925
        %v927 = vrot.slane %v926, 1
        %v928 = vadd.f32 %v926, %v927
        %v929 = vsel %vm598, %v907, 0.0
        %v930 = vrot.slane %v929, 4
        %v931 = vadd.f32 %v929, %v930
        %v932 = vrot.slane %v931, 2
        %v933 = vadd.f32 %v931, %v932
        %v934 = vrot.slane %v933, 1
        %v935 = vadd.f32 %v933, %v934
        %v936 = vmul.f32 %v914, %v627
        %v937 = vmul.f32 %v921, %v627
        %v938 = vmul.f32 %v928, %v627
        %v939 = vmul.f32 %v935, %v627
        %s940 = scalar_lea.vmem %s2, 4
        %v941 = vld [vmem:[%s940] sm:$0xf]
        %v946 = vsel %vm476, %v937, %v936
        %v947 = vsel %vm478, %v938, %v946
        %v948 = vsel %vm480, %v939, %v947
        %vm949 = vcmask 31744
        %v951 = vsel %vm949, %v941, 0
        %vm953 = vcmask 1043456
        %v954 = vsel %vm953, %v948, 0
        %956 = vmatprep.subr.mxu0 0.0
        %957 = vmatpush1.msra.mxu0 %v954
        %958 = vmatprep.subr.mxu0 0.0
        %959 = vmatpush1.msra.mxu0 0.0
        %960 = vmatprep.subr.mxu0 0.0
        %961 = vmatpush1.msra.mxu0 0.0
        %962 = vmatprep.subr.mxu0 0.0
        %963 = vmatpush1.msra.mxu0 0.0
        %964 = vmatprep.subr.mxu0 0.0
        %965 = vmatpush1.msra.mxu0 0.0
        %966 = vmatprep.subr.mxu0 0.0
        %967 = vmatpush1.msra.mxu0 0.0
        %968 = vmatprep.subr.mxu0 0.0
        %969 = vmatpush1.msra.mxu0 0.0
        %970 = vmatprep.subr.mxu0 0.0
        %971 = vmatpush1.msra.mxu0 0.0
        %972 = vmatprep.subr.mxu0 0.0
        %973 = vmatpush1.msra.mxu0 0.0
        %974 = vmatprep.subr.mxu0 0.0
        %975 = vmatpush1.msra.mxu0 0.0
        %976 = vmatprep.subr.mxu0 0.0
        %977 = vmatpush1.msra.mxu0 0.0
        %978 = vmatprep.subr.mxu0 0.0
        %979 = vmatpush1.msra.mxu0 0.0
        %980 = vmatprep.subr.mxu0 0.0
        %981 = vmatpush1.msra.mxu0 0.0
        %982 = vmatprep.subr.mxu0 0.0
        %983 = vmatpush1.msra.mxu0 0.0
        %984 = vmatprep.subr.mxu0 0.0
        %985 = vmatpush1.msra.mxu0 0.0
        %986 = vmatprep.subr.mxu0 0.0
        %987 = vmatpush1.msra.mxu0 0.0
        %988 = vmatprep.subr.mxu0 0.0
        %989 = vmatpush1.msra.mxu0 0.0
        %990 = vmatprep.subr.mxu0 0.0
        %991 = vmatpush1.msra.mxu0 0.0
        %992 = vmatprep.subr.mxu0 0.0
        %993 = vmatpush1.msra.mxu0 0.0
        %994 = vmatprep.subr.mxu0 0.0
        %995 = vmatpush1.msra.mxu0 0.0
        %996 = vmatprep.subr.mxu0 0.0
        %997 = vmatpush1.msra.mxu0 0.0
        %998 = vmatprep.subr.mxu0 0.0
        %999 = vmatpush1.msra.mxu0 0.0
        %1000 = vmatprep.subr.mxu0 0.0
        %1001 = vmatpush1.msra.mxu0 0.0
        %1002 = vmatprep.subr.mxu0 0.0
        %1003 = vmatpush1.msra.mxu0 0.0
        %1004 = vmatprep.subr.mxu0 0.0
        %1005 = vmatpush1.msra.mxu0 0.0
        %1006 = vmatprep.subr.mxu0 0.0
        %1007 = vmatpush1.msra.mxu0 0.0
        %1008 = vmatprep.subr.mxu0 0.0
        %1009 = vmatpush1.msra.mxu0 0.0
        %1010 = vmatprep.subr.mxu0 0.0
        %1011 = vmatpush1.msra.mxu0 0.0
        %1012 = vmatprep.subr.mxu0 0.0
        %1013 = vmatpush1.msra.mxu0 0.0
        %1014 = vmatprep.subr.mxu0 0.0
        %1015 = vmatpush1.msra.mxu0 0.0
        %1016 = vmatprep.subr.mxu0 0.0
        %1017 = vmatpush1.msra.mxu0 0.0
        %1018 = vmatprep.subr.mxu0 0.0
        %1019 = vmatpush1.msra.mxu0 0.0
        %1020 = vmatprep.mubr.f32.mxu0 0.0
        %1021 = vmatmul.mubr.f32.gmra.mrb[0].mxu0 %v951
        %v1022 = vpop.f32.mrb[0].mxu0
        %v1023 = vadd.f32 0.0, %v1022
        %v1024 = vpop.f32.mrb[0].mxu0
        %1025 = vdwg.mxu0
        %v1030 = vsel %vm476, %v629, %v628
        %v1031 = vsel %vm478, %v630, %v1030
        %v1032 = vsel %vm480, %v631, %v1031
        %v1034 = vsel %vm949, %v632, 0
        %v1036 = vsel %vm953, %v1032, 0
        %1038 = vmatprep.subr.mxu0 0.0
        %1039 = vmatpush1.msra.mxu0 %v1036
        %1040 = vmatprep.subr.mxu0 0.0
        %1041 = vmatpush1.msra.mxu0 0.0
        %1042 = vmatprep.subr.mxu0 0.0
        %1043 = vmatpush1.msra.mxu0 0.0
        %1044 = vmatprep.subr.mxu0 0.0
        %1045 = vmatpush1.msra.mxu0 0.0
        %1046 = vmatprep.subr.mxu0 0.0
        %1047 = vmatpush1.msra.mxu0 0.0
        %1048 = vmatprep.subr.mxu0 0.0
        %1049 = vmatpush1.msra.mxu0 0.0
        %1050 = vmatprep.subr.mxu0 0.0
        %1051 = vmatpush1.msra.mxu0 0.0
        %1052 = vmatprep.subr.mxu0 0.0
        %1053 = vmatpush1.msra.mxu0 0.0
        %1054 = vmatprep.subr.mxu0 0.0
        %1055 = vmatpush1.msra.mxu0 0.0
        %1056 = vmatprep.subr.mxu0 0.0
        %1057 = vmatpush1.msra.mxu0 0.0
        %1058 = vmatprep.subr.mxu0 0.0
        %1059 = vmatpush1.msra.mxu0 0.0
        %1060 = vmatprep.subr.mxu0 0.0
        %1061 = vmatpush1.msra.mxu0 0.0
        %1062 = vmatprep.subr.mxu0 0.0
        %1063 = vmatpush1.msra.mxu0 0.0
        %1064 = vmatprep.subr.mxu0 0.0
        %1065 = vmatpush1.msra.mxu0 0.0
        %1066 = vmatprep.subr.mxu0 0.0
        %1067 = vmatpush1.msra.mxu0 0.0
        %1068 = vmatprep.subr.mxu0 0.0
        %1069 = vmatpush1.msra.mxu0 0.0
        %1070 = vmatprep.subr.mxu0 0.0
        %1071 = vmatpush1.msra.mxu0 0.0
        %1072 = vmatprep.subr.mxu0 0.0
        %1073 = vmatpush1.msra.mxu0 0.0
        %1074 = vmatprep.subr.mxu0 0.0
        %1075 = vmatpush1.msra.mxu0 0.0
        %1076 = vmatprep.subr.mxu0 0.0
        %1077 = vmatpush1.msra.mxu0 0.0
        %1078 = vmatprep.subr.mxu0 0.0
        %1079 = vmatpush1.msra.mxu0 0.0
        %1080 = vmatprep.subr.mxu0 0.0
        %1081 = vmatpush1.msra.mxu0 0.0
        %1082 = vmatprep.subr.mxu0 0.0
        %1083 = vmatpush1.msra.mxu0 0.0
        %1084 = vmatprep.subr.mxu0 0.0
        %1085 = vmatpush1.msra.mxu0 0.0
        %1086 = vmatprep.subr.mxu0 0.0
        %1087 = vmatpush1.msra.mxu0 0.0
        %1088 = vmatprep.subr.mxu0 0.0
        %1089 = vmatpush1.msra.mxu0 0.0
        %1090 = vmatprep.subr.mxu0 0.0
        %1091 = vmatpush1.msra.mxu0 0.0
        %1092 = vmatprep.subr.mxu0 0.0
        %1093 = vmatpush1.msra.mxu0 0.0
        %1094 = vmatprep.subr.mxu0 0.0
        %1095 = vmatpush1.msra.mxu0 0.0
        %1096 = vmatprep.subr.mxu0 0.0
        %1097 = vmatpush1.msra.mxu0 0.0
        %1098 = vmatprep.subr.mxu0 0.0
        %1099 = vmatpush1.msra.mxu0 0.0
        %1100 = vmatprep.subr.mxu0 0.0
        %1101 = vmatpush1.msra.mxu0 0.0
        %1102 = vmatprep.mubr.f32.mxu0 0.0
        %1103 = vmatmul.mubr.f32.gmra.mrb[0].mxu0 %v1034
        %v1104 = vpop.f32.mrb[0].mxu0
        %v1105 = vadd.f32 %v1023, %v1104
        %v1106 = vpop.f32.mrb[0].mxu0
        %1107 = vdwg.mxu0
        %v1108 = vsub.f32 %v305, %v305
        %v1109 = vsub.f32 %v305, %v306
        %v1110 = vsub.f32 %v305, %v307
        %v1111 = vsub.f32 %v305, %v308
        %v1112 = vsub.f32 %v306, %v305
        %v1113 = vsub.f32 %v306, %v306
        %v1114 = vsub.f32 %v306, %v307
        %v1115 = vsub.f32 %v306, %v308
        %v1116 = vsub.f32 %v307, %v305
        %v1117 = vsub.f32 %v307, %v306
        %v1118 = vsub.f32 %v307, %v307
        %v1119 = vsub.f32 %v307, %v308
        %v1120 = vsub.f32 %v308, %v305
        %v1121 = vsub.f32 %v308, %v306
        %v1122 = vsub.f32 %v308, %v307
        %v1123 = vsub.f32 %v308, %v308
        %v1124 = vmul.f32 %v1108, %v1108
        %v1125 = vmul.f32 %v1109, %v1109
        %v1126 = vmul.f32 %v1110, %v1110
        %v1127 = vmul.f32 %v1111, %v1111
        %v1128 = vmul.f32 %v1112, %v1112
        %v1129 = vmul.f32 %v1113, %v1113
        %v1130 = vmul.f32 %v1114, %v1114
        %v1131 = vmul.f32 %v1115, %v1115
        %v1132 = vmul.f32 %v1116, %v1116
        %v1133 = vmul.f32 %v1117, %v1117
        %v1134 = vmul.f32 %v1118, %v1118
        %v1135 = vmul.f32 %v1119, %v1119
        %v1136 = vmul.f32 %v1120, %v1120
        %v1137 = vmul.f32 %v1121, %v1121
        %v1138 = vmul.f32 %v1122, %v1122
        %v1139 = vmul.f32 %v1123, %v1123
        %v1140 = vsel %vm347, %v1124, 0.0
        %v1141 = vrot.slane %v1140, 4
        %v1142 = vadd.f32 %v1140, %v1141
        %v1143 = vrot.slane %v1142, 2
        %v1144 = vadd.f32 %v1142, %v1143
        %v1145 = vrot.slane %v1144, 1
        %v1146 = vadd.f32 %v1144, %v1145
        %v1147 = vsel %vm347, %v1125, 0.0
        %v1148 = vrot.slane %v1147, 4
        %v1149 = vadd.f32 %v1147, %v1148
        %v1150 = vrot.slane %v1149, 2
        %v1151 = vadd.f32 %v1149, %v1150
        %v1152 = vrot.slane %v1151, 1
        %v1153 = vadd.f32 %v1151, %v1152
        %v1154 = vsel %vm347, %v1126, 0.0
        %v1155 = vrot.slane %v1154, 4
        %v1156 = vadd.f32 %v1154, %v1155
        %v1157 = vrot.slane %v1156, 2
        %v1158 = vadd.f32 %v1156, %v1157
        %v1159 = vrot.slane %v1158, 1
        %v1160 = vadd.f32 %v1158, %v1159
        %v1161 = vsel %vm347, %v1127, 0.0
        %v1162 = vrot.slane %v1161, 4
        %v1163 = vadd.f32 %v1161, %v1162
        %v1164 = vrot.slane %v1163, 2
        %v1165 = vadd.f32 %v1163, %v1164
        %v1166 = vrot.slane %v1165, 1
        %v1167 = vadd.f32 %v1165, %v1166
        %v1168 = vsel %vm347, %v1128, 0.0
        %v1169 = vrot.slane %v1168, 4
        %v1170 = vadd.f32 %v1168, %v1169
        %v1171 = vrot.slane %v1170, 2
        %v1172 = vadd.f32 %v1170, %v1171
        %v1173 = vrot.slane %v1172, 1
        %v1174 = vadd.f32 %v1172, %v1173
        %v1175 = vsel %vm347, %v1129, 0.0
        %v1176 = vrot.slane %v1175, 4
        %v1177 = vadd.f32 %v1175, %v1176
        %v1178 = vrot.slane %v1177, 2
        %v1179 = vadd.f32 %v1177, %v1178
        %v1180 = vrot.slane %v1179, 1
        %v1181 = vadd.f32 %v1179, %v1180
        %v1182 = vsel %vm347, %v1130, 0.0
        %v1183 = vrot.slane %v1182, 4
        %v1184 = vadd.f32 %v1182, %v1183
        %v1185 = vrot.slane %v1184, 2
        %v1186 = vadd.f32 %v1184, %v1185
        %v1187 = vrot.slane %v1186, 1
        %v1188 = vadd.f32 %v1186, %v1187
        %v1189 = vsel %vm347, %v1131, 0.0
        %v1190 = vrot.slane %v1189, 4
        %v1191 = vadd.f32 %v1189, %v1190
        %v1192 = vrot.slane %v1191, 2
        %v1193 = vadd.f32 %v1191, %v1192
        %v1194 = vrot.slane %v1193, 1
        %v1195 = vadd.f32 %v1193, %v1194
        %v1196 = vsel %vm347, %v1132, 0.0
        %v1197 = vrot.slane %v1196, 4
        %v1198 = vadd.f32 %v1196, %v1197
        %v1199 = vrot.slane %v1198, 2
        %v1200 = vadd.f32 %v1198, %v1199
        %v1201 = vrot.slane %v1200, 1
        %v1202 = vadd.f32 %v1200, %v1201
        %v1203 = vsel %vm347, %v1133, 0.0
        %v1204 = vrot.slane %v1203, 4
        %v1205 = vadd.f32 %v1203, %v1204
        %v1206 = vrot.slane %v1205, 2
        %v1207 = vadd.f32 %v1205, %v1206
        %v1208 = vrot.slane %v1207, 1
        %v1209 = vadd.f32 %v1207, %v1208
        %v1210 = vsel %vm347, %v1134, 0.0
        %v1211 = vrot.slane %v1210, 4
        %v1212 = vadd.f32 %v1210, %v1211
        %v1213 = vrot.slane %v1212, 2
        %v1214 = vadd.f32 %v1212, %v1213
        %v1215 = vrot.slane %v1214, 1
        %v1216 = vadd.f32 %v1214, %v1215
        %v1217 = vsel %vm347, %v1135, 0.0
        %v1218 = vrot.slane %v1217, 4
        %v1219 = vadd.f32 %v1217, %v1218
        %v1220 = vrot.slane %v1219, 2
        %v1221 = vadd.f32 %v1219, %v1220
        %v1222 = vrot.slane %v1221, 1
        %v1223 = vadd.f32 %v1221, %v1222
        %v1224 = vsel %vm347, %v1136, 0.0
        %v1225 = vrot.slane %v1224, 4
        %v1226 = vadd.f32 %v1224, %v1225
        %v1227 = vrot.slane %v1226, 2
        %v1228 = vadd.f32 %v1226, %v1227
        %v1229 = vrot.slane %v1228, 1
        %v1230 = vadd.f32 %v1228, %v1229
        %v1231 = vsel %vm347, %v1137, 0.0
        %v1232 = vrot.slane %v1231, 4
        %v1233 = vadd.f32 %v1231, %v1232
        %v1234 = vrot.slane %v1233, 2
        %v1235 = vadd.f32 %v1233, %v1234
        %v1236 = vrot.slane %v1235, 1
        %v1237 = vadd.f32 %v1235, %v1236
        %v1238 = vsel %vm347, %v1138, 0.0
        %v1239 = vrot.slane %v1238, 4
        %v1240 = vadd.f32 %v1238, %v1239
        %v1241 = vrot.slane %v1240, 2
        %v1242 = vadd.f32 %v1240, %v1241
        %v1243 = vrot.slane %v1242, 1
        %v1244 = vadd.f32 %v1242, %v1243
        %v1245 = vsel %vm347, %v1139, 0.0
        %v1246 = vrot.slane %v1245, 4
        %v1247 = vadd.f32 %v1245, %v1246
        %v1248 = vrot.slane %v1247, 2
        %v1249 = vadd.f32 %v1247, %v1248
        %v1250 = vrot.slane %v1249, 1
        %v1251 = vadd.f32 %v1249, %v1250
        %v1268 = vsel %vm476, %v1153, %v1146
        %v1269 = vsel %vm478, %v1160, %v1268
        %v1270 = vsel %vm480, %v1167, %v1269
        %v1271 = vsel %vm482, %v1174, %v1270
        %v1272 = vsel %vm484, %v1181, %v1271
        %v1273 = vsel %vm486, %v1188, %v1272
        %v1274 = vsel %vm488, %v1195, %v1273
        %v1275 = vsel %vm476, %v1209, %v1202
        %v1276 = vsel %vm478, %v1216, %v1275
        %v1277 = vsel %vm480, %v1223, %v1276
        %v1278 = vsel %vm482, %v1230, %v1277
        %v1279 = vsel %vm484, %v1237, %v1278
        %v1280 = vsel %vm486, %v1244, %v1279
        %v1281 = vsel %vm488, %v1251, %v1280
        %v1282 = vsel %vm347, %v1274, 0
        %v1284 = vsel %vm347, %v1281, 0
        %1286 = vmatprep.subr.mxu0 0.0
        %1287 = vmatpush1.msra.mxu0 %v313
        %1288 = vmatprep.subr.mxu0 0.0
        %1289 = vmatpush1.msra.mxu0 %v314
        %1290 = vmatprep.subr.mxu0 0.0
        %1291 = vmatpush1.msra.mxu0 0.0
        %1292 = vmatprep.subr.mxu0 0.0
        %1293 = vmatpush1.msra.mxu0 0.0
        %1294 = vmatprep.subr.mxu0 0.0
        %1295 = vmatpush1.msra.mxu0 0.0
        %1296 = vmatprep.subr.mxu0 0.0
        %1297 = vmatpush1.msra.mxu0 0.0
        %1298 = vmatprep.subr.mxu0 0.0
        %1299 = vmatpush1.msra.mxu0 0.0
        %1300 = vmatprep.subr.mxu0 0.0
        %1301 = vmatpush1.msra.mxu0 0.0
        %1302 = vmatprep.subr.mxu0 0.0
        %1303 = vmatpush1.msra.mxu0 0.0
        %1304 = vmatprep.subr.mxu0 0.0
        %1305 = vmatpush1.msra.mxu0 0.0
        %1306 = vmatprep.subr.mxu0 0.0
        %1307 = vmatpush1.msra.mxu0 0.0
        %1308 = vmatprep.subr.mxu0 0.0
        %1309 = vmatpush1.msra.mxu0 0.0
        %1310 = vmatprep.subr.mxu0 0.0
        %1311 = vmatpush1.msra.mxu0 0.0
        %1312 = vmatprep.subr.mxu0 0.0
        %1313 = vmatpush1.msra.mxu0 0.0
        %1314 = vmatprep.subr.mxu0 0.0
        %1315 = vmatpush1.msra.mxu0 0.0
        %1316 = vmatprep.subr.mxu0 0.0
        %1317 = vmatpush1.msra.mxu0 0.0
        %1318 = vmatprep.subr.mxu0 0.0
        %1319 = vmatpush1.msra.mxu0 0.0
        %1320 = vmatprep.subr.mxu0 0.0
        %1321 = vmatpush1.msra.mxu0 0.0
        %1322 = vmatprep.subr.mxu0 0.0
        %1323 = vmatpush1.msra.mxu0 0.0
        %1324 = vmatprep.subr.mxu0 0.0
        %1325 = vmatpush1.msra.mxu0 0.0
        %1326 = vmatprep.subr.mxu0 0.0
        %1327 = vmatpush1.msra.mxu0 0.0
        %1328 = vmatprep.subr.mxu0 0.0
        %1329 = vmatpush1.msra.mxu0 0.0
        %1330 = vmatprep.subr.mxu0 0.0
        %1331 = vmatpush1.msra.mxu0 0.0
        %1332 = vmatprep.subr.mxu0 0.0
        %1333 = vmatpush1.msra.mxu0 0.0
        %1334 = vmatprep.subr.mxu0 0.0
        %1335 = vmatpush1.msra.mxu0 0.0
        %1336 = vmatprep.subr.mxu0 0.0
        %1337 = vmatpush1.msra.mxu0 0.0
        %1338 = vmatprep.subr.mxu0 0.0
        %1339 = vmatpush1.msra.mxu0 0.0
        %1340 = vmatprep.subr.mxu0 0.0
        %1341 = vmatpush1.msra.mxu0 0.0
        %1342 = vmatprep.subr.mxu0 0.0
        %1343 = vmatpush1.msra.mxu0 0.0
        %1344 = vmatprep.subr.mxu0 0.0
        %1345 = vmatpush1.msra.mxu0 0.0
        %1346 = vmatprep.subr.mxu0 0.0
        %1347 = vmatpush1.msra.mxu0 0.0
        %1348 = vmatprep.subr.mxu0 0.0
        %1349 = vmatpush1.msra.mxu0 0.0
        %1350 = vmatprep.mubr.f32.mxu0 0.0
        %1351 = vmatmul.mubr.f32.gmra.mrb[0].mxu0 %v1282
        %v1352 = vpop.f32.mrb[0].mxu0
        %v1353 = vadd.f32 0.0, %v1352
        %v1354 = vpop.f32.mrb[0].mxu0
        %1355 = vmatprep.mubr.f32.mxu0 0.0
        %1356 = vmatmul.mubr.f32.gmra.mrb[0].mxu0 %v1284
        %v1357 = vpop.f32.mrb[0].mxu0
        %v1358 = vadd.f32 0.0, %v1357
        %v1359 = vpop.f32.mrb[0].mxu0
        %1360 = vdwg.mxu0
        %v1363 = vcombine.high %v1353, %v1353
        %v1364 = vcombine.high %v1358, %v1358
        %v1367 = vmax.f32 %v1353, 0.0
        %v1368 = vmax.f32 %v1363, 0.0
        %v1369 = vmax.f32 %v1358, 0.0
        %v1370 = vmax.f32 %v1364, 0.0
        %v1371 = vmul.f32 %v1367, -0.5
        %v1372 = vmul.f32 %v1368, -0.5
        %v1373 = vmul.f32 %v1369, -0.5
        %v1374 = vmul.f32 %v1370, -0.5
        %v1375 = vmul.f32 %v1371, 1.442695
        %v1376 = vpow.pop %v1375
        %v1377 = vmul.f32 %v1372, 1.442695
        %v1378 = vpow.pop %v1377
        %v1379 = vmul.f32 %v1373, 1.442695
        %v1380 = vpow.pop %v1379
        %v1381 = vmul.f32 %v1374, 1.442695
        %v1382 = vpow.pop %v1381
        %v1383 = vsel %vm598, %v1376, 0.0
        %v1384 = vrot.slane %v1383, 4
        %v1385 = vadd.f32 %v1383, %v1384
        %v1386 = vrot.slane %v1385, 2
        %v1387 = vadd.f32 %v1385, %v1386
        %v1388 = vrot.slane %v1387, 1
        %v1389 = vadd.f32 %v1387, %v1388
        %v1390 = vsel %vm598, %v1378, 0.0
        %v1391 = vrot.slane %v1390, 4
        %v1392 = vadd.f32 %v1390, %v1391
        %v1393 = vrot.slane %v1392, 2
        %v1394 = vadd.f32 %v1392, %v1393
        %v1395 = vrot.slane %v1394, 1
        %v1396 = vadd.f32 %v1394, %v1395
        %v1397 = vsel %vm598, %v1380, 0.0
        %v1398 = vrot.slane %v1397, 4
        %v1399 = vadd.f32 %v1397, %v1398
        %v1400 = vrot.slane %v1399, 2
        %v1401 = vadd.f32 %v1399, %v1400
        %v1402 = vrot.slane %v1401, 1
        %v1403 = vadd.f32 %v1401, %v1402
        %v1404 = vsel %vm598, %v1382, 0.0
        %v1405 = vrot.slane %v1404, 4
        %v1406 = vadd.f32 %v1404, %v1405
        %v1407 = vrot.slane %v1406, 2
        %v1408 = vadd.f32 %v1406, %v1407
        %v1409 = vrot.slane %v1408, 1
        %v1410 = vadd.f32 %v1408, %v1409
        %v1411 = vmul.f32 %v1389, %v627
        %v1412 = vmul.f32 %v1396, %v627
        %v1413 = vmul.f32 %v1403, %v627
        %v1414 = vmul.f32 %v1410, %v627
        %s1415 = scalar_lea.vmem %s2, 8
        %v1416 = vld [vmem:[%s1415] sm:$0xf]
        %v1421 = vsel %vm476, %v1412, %v1411
        %v1422 = vsel %vm478, %v1413, %v1421
        %v1423 = vsel %vm480, %v1414, %v1422
        %v1425 = vsel %vm949, %v1416, 0
        %v1427 = vsel %vm953, %v1423, 0
        %1429 = vmatprep.subr.mxu0 0.0
        %1430 = vmatpush1.msra.mxu0 %v1427
        %1431 = vmatprep.subr.mxu0 0.0
        %1432 = vmatpush1.msra.mxu0 0.0
        %1433 = vmatprep.subr.mxu0 0.0
        %1434 = vmatpush1.msra.mxu0 0.0
        %1435 = vmatprep.subr.mxu0 0.0
        %1436 = vmatpush1.msra.mxu0 0.0
        %1437 = vmatprep.subr.mxu0 0.0
        %1438 = vmatpush1.msra.mxu0 0.0
        %1439 = vmatprep.subr.mxu0 0.0
        %1440 = vmatpush1.msra.mxu0 0.0
        %1441 = vmatprep.subr.mxu0 0.0
        %1442 = vmatpush1.msra.mxu0 0.0
        %1443 = vmatprep.subr.mxu0 0.0
        %1444 = vmatpush1.msra.mxu0 0.0
        %1445 = vmatprep.subr.mxu0 0.0
        %1446 = vmatpush1.msra.mxu0 0.0
        %1447 = vmatprep.subr.mxu0 0.0
        %1448 = vmatpush1.msra.mxu0 0.0
        %1449 = vmatprep.subr.mxu0 0.0
        %1450 = vmatpush1.msra.mxu0 0.0
        %1451 = vmatprep.subr.mxu0 0.0
        %1452 = vmatpush1.msra.mxu0 0.0
        %1453 = vmatprep.subr.mxu0 0.0
        %1454 = vmatpush1.msra.mxu0 0.0
        %1455 = vmatprep.subr.mxu0 0.0
        %1456 = vmatpush1.msra.mxu0 0.0
        %1457 = vmatprep.subr.mxu0 0.0
        %1458 = vmatpush1.msra.mxu0 0.0
        %1459 = vmatprep.subr.mxu0 0.0
        %1460 = vmatpush1.msra.mxu0 0.0
        %1461 = vmatprep.subr.mxu0 0.0
        %1462 = vmatpush1.msra.mxu0 0.0
        %1463 = vmatprep.subr.mxu0 0.0
        %1464 = vmatpush1.msra.mxu0 0.0
        %1465 = vmatprep.subr.mxu0 0.0
        %1466 = vmatpush1.msra.mxu0 0.0
        %1467 = vmatprep.subr.mxu0 0.0
        %1468 = vmatpush1.msra.mxu0 0.0
        %1469 = vmatprep.subr.mxu0 0.0
        %1470 = vmatpush1.msra.mxu0 0.0
        %1471 = vmatprep.subr.mxu0 0.0
        %1472 = vmatpush1.msra.mxu0 0.0
        %1473 = vmatprep.subr.mxu0 0.0
        %1474 = vmatpush1.msra.mxu0 0.0
        %1475 = vmatprep.subr.mxu0 0.0
        %1476 = vmatpush1.msra.mxu0 0.0
        %1477 = vmatprep.subr.mxu0 0.0
        %1478 = vmatpush1.msra.mxu0 0.0
        %1479 = vmatprep.subr.mxu0 0.0
        %1480 = vmatpush1.msra.mxu0 0.0
        %1481 = vmatprep.subr.mxu0 0.0
        %1482 = vmatpush1.msra.mxu0 0.0
        %1483 = vmatprep.subr.mxu0 0.0
        %1484 = vmatpush1.msra.mxu0 0.0
        %1485 = vmatprep.subr.mxu0 0.0
        %1486 = vmatpush1.msra.mxu0 0.0
        %1487 = vmatprep.subr.mxu0 0.0
        %1488 = vmatpush1.msra.mxu0 0.0
        %1489 = vmatprep.subr.mxu0 0.0
        %1490 = vmatpush1.msra.mxu0 0.0
        %1491 = vmatprep.subr.mxu0 0.0
        %1492 = vmatpush1.msra.mxu0 0.0
        %1493 = vmatprep.mubr.f32.mxu0 0.0
        %1494 = vmatmul.mubr.f32.gmra.mrb[0].mxu0 %v1425
        %v1495 = vpop.f32.mrb[0].mxu0
        %v1496 = vadd.f32 0.0, %v1495
        %v1497 = vpop.f32.mrb[0].mxu0
        %1498 = vdwg.mxu0
        %v1499 = vadd.f32 %v1105, %v1496
        %v1500 = vsub.f32 %v309, %v309
        %v1501 = vsub.f32 %v309, %v310
        %v1502 = vsub.f32 %v309, %v311
        %v1503 = vsub.f32 %v309, %v312
        %v1504 = vsub.f32 %v310, %v309
        %v1505 = vsub.f32 %v310, %v310
        %v1506 = vsub.f32 %v310, %v311
        %v1507 = vsub.f32 %v310, %v312
        %v1508 = vsub.f32 %v311, %v309
        %v1509 = vsub.f32 %v311, %v310
        %v1510 = vsub.f32 %v311, %v311
        %v1511 = vsub.f32 %v311, %v312
        %v1512 = vsub.f32 %v312, %v309
        %v1513 = vsub.f32 %v312, %v310
        %v1514 = vsub.f32 %v312, %v311
        %v1515 = vsub.f32 %v312, %v312
        %v1516 = vmul.f32 %v1500, %v1500
        %v1517 = vmul.f32 %v1501, %v1501
        %v1518 = vmul.f32 %v1502, %v1502
        %v1519 = vmul.f32 %v1503, %v1503
        %v1520 = vmul.f32 %v1504, %v1504
        %v1521 = vmul.f32 %v1505, %v1505
        %v1522 = vmul.f32 %v1506, %v1506
        %v1523 = vmul.f32 %v1507, %v1507
        %v1524 = vmul.f32 %v1508, %v1508
        %v1525 = vmul.f32 %v1509, %v1509
        %v1526 = vmul.f32 %v1510, %v1510
        %v1527 = vmul.f32 %v1511, %v1511
        %v1528 = vmul.f32 %v1512, %v1512
        %v1529 = vmul.f32 %v1513, %v1513
        %v1530 = vmul.f32 %v1514, %v1514
        %v1531 = vmul.f32 %v1515, %v1515
        %v1532 = vsel %vm347, %v1516, 0.0
        %v1533 = vrot.slane %v1532, 4
        %v1534 = vadd.f32 %v1532, %v1533
        %v1535 = vrot.slane %v1534, 2
        %v1536 = vadd.f32 %v1534, %v1535
        %v1537 = vrot.slane %v1536, 1
        %v1538 = vadd.f32 %v1536, %v1537
        %v1539 = vsel %vm347, %v1517, 0.0
        %v1540 = vrot.slane %v1539, 4
        %v1541 = vadd.f32 %v1539, %v1540
        %v1542 = vrot.slane %v1541, 2
        %v1543 = vadd.f32 %v1541, %v1542
        %v1544 = vrot.slane %v1543, 1
        %v1545 = vadd.f32 %v1543, %v1544
        %v1546 = vsel %vm347, %v1518, 0.0
        %v1547 = vrot.slane %v1546, 4
        %v1548 = vadd.f32 %v1546, %v1547
        %v1549 = vrot.slane %v1548, 2
        %v1550 = vadd.f32 %v1548, %v1549
        %v1551 = vrot.slane %v1550, 1
        %v1552 = vadd.f32 %v1550, %v1551
        %v1553 = vsel %vm347, %v1519, 0.0
        %v1554 = vrot.slane %v1553, 4
        %v1555 = vadd.f32 %v1553, %v1554
        %v1556 = vrot.slane %v1555, 2
        %v1557 = vadd.f32 %v1555, %v1556
        %v1558 = vrot.slane %v1557, 1
        %v1559 = vadd.f32 %v1557, %v1558
        %v1560 = vsel %vm347, %v1520, 0.0
        %v1561 = vrot.slane %v1560, 4
        %v1562 = vadd.f32 %v1560, %v1561
        %v1563 = vrot.slane %v1562, 2
        %v1564 = vadd.f32 %v1562, %v1563
        %v1565 = vrot.slane %v1564, 1
        %v1566 = vadd.f32 %v1564, %v1565
        %v1567 = vsel %vm347, %v1521, 0.0
        %v1568 = vrot.slane %v1567, 4
        %v1569 = vadd.f32 %v1567, %v1568
        %v1570 = vrot.slane %v1569, 2
        %v1571 = vadd.f32 %v1569, %v1570
        %v1572 = vrot.slane %v1571, 1
        %v1573 = vadd.f32 %v1571, %v1572
        %v1574 = vsel %vm347, %v1522, 0.0
        %v1575 = vrot.slane %v1574, 4
        %v1576 = vadd.f32 %v1574, %v1575
        %v1577 = vrot.slane %v1576, 2
        %v1578 = vadd.f32 %v1576, %v1577
        %v1579 = vrot.slane %v1578, 1
        %v1580 = vadd.f32 %v1578, %v1579
        %v1581 = vsel %vm347, %v1523, 0.0
        %v1582 = vrot.slane %v1581, 4
        %v1583 = vadd.f32 %v1581, %v1582
        %v1584 = vrot.slane %v1583, 2
        %v1585 = vadd.f32 %v1583, %v1584
        %v1586 = vrot.slane %v1585, 1
        %v1587 = vadd.f32 %v1585, %v1586
        %v1588 = vsel %vm347, %v1524, 0.0
        %v1589 = vrot.slane %v1588, 4
        %v1590 = vadd.f32 %v1588, %v1589
        %v1591 = vrot.slane %v1590, 2
        %v1592 = vadd.f32 %v1590, %v1591
        %v1593 = vrot.slane %v1592, 1
        %v1594 = vadd.f32 %v1592, %v1593
        %v1595 = vsel %vm347, %v1525, 0.0
        %v1596 = vrot.slane %v1595, 4
        %v1597 = vadd.f32 %v1595, %v1596
        %v1598 = vrot.slane %v1597, 2
        %v1599 = vadd.f32 %v1597, %v1598
        %v1600 = vrot.slane %v1599, 1
        %v1601 = vadd.f32 %v1599, %v1600
        %v1602 = vsel %vm347, %v1526, 0.0
        %v1603 = vrot.slane %v1602, 4
        %v1604 = vadd.f32 %v1602, %v1603
        %v1605 = vrot.slane %v1604, 2
        %v1606 = vadd.f32 %v1604, %v1605
        %v1607 = vrot.slane %v1606, 1
        %v1608 = vadd.f32 %v1606, %v1607
        %v1609 = vsel %vm347, %v1527, 0.0
        %v1610 = vrot.slane %v1609, 4
        %v1611 = vadd.f32 %v1609, %v1610
        %v1612 = vrot.slane %v1611, 2
        %v1613 = vadd.f32 %v1611, %v1612
        %v1614 = vrot.slane %v1613, 1
        %v1615 = vadd.f32 %v1613, %v1614
        %v1616 = vsel %vm347, %v1528, 0.0
        %v1617 = vrot.slane %v1616, 4
        %v1618 = vadd.f32 %v1616, %v1617
        %v1619 = vrot.slane %v1618, 2
        %v1620 = vadd.f32 %v1618, %v1619
        %v1621 = vrot.slane %v1620, 1
        %v1622 = vadd.f32 %v1620, %v1621
        %v1623 = vsel %vm347, %v1529, 0.0
        %v1624 = vrot.slane %v1623, 4
        %v1625 = vadd.f32 %v1623, %v1624
        %v1626 = vrot.slane %v1625, 2
        %v1627 = vadd.f32 %v1625, %v1626
        %v1628 = vrot.slane %v1627, 1
        %v1629 = vadd.f32 %v1627, %v1628
        %v1630 = vsel %vm347, %v1530, 0.0
        %v1631 = vrot.slane %v1630, 4
        %v1632 = vadd.f32 %v1630, %v1631
        %v1633 = vrot.slane %v1632, 2
        %v1634 = vadd.f32 %v1632, %v1633
        %v1635 = vrot.slane %v1634, 1
        %v1636 = vadd.f32 %v1634, %v1635
        %v1637 = vsel %vm347, %v1531, 0.0
        %v1638 = vrot.slane %v1637, 4
        %v1639 = vadd.f32 %v1637, %v1638
        %v1640 = vrot.slane %v1639, 2
        %v1641 = vadd.f32 %v1639, %v1640
        %v1642 = vrot.slane %v1641, 1
        %v1643 = vadd.f32 %v1641, %v1642
        %v1660 = vsel %vm476, %v1545, %v1538
        %v1661 = vsel %vm478, %v1552, %v1660
        %v1662 = vsel %vm480, %v1559, %v1661
        %v1663 = vsel %vm482, %v1566, %v1662
        %v1664 = vsel %vm484, %v1573, %v1663
        %v1665 = vsel %vm486, %v1580, %v1664
        %v1666 = vsel %vm488, %v1587, %v1665
        %v1667 = vsel %vm476, %v1601, %v1594
        %v1668 = vsel %vm478, %v1608, %v1667
        %v1669 = vsel %vm480, %v1615, %v1668
        %v1670 = vsel %vm482, %v1622, %v1669
        %v1671 = vsel %vm484, %v1629, %v1670
        %v1672 = vsel %vm486, %v1636, %v1671
        %v1673 = vsel %vm488, %v1643, %v1672
        %v1674 = vsel %vm347, %v1666, 0
        %v1676 = vsel %vm347, %v1673, 0
        %1678 = vmatprep.subr.mxu0 0.0
        %1679 = vmatpush1.msra.mxu0 %v313
        %1680 = vmatprep.subr.mxu0 0.0
        %1681 = vmatpush1.msra.mxu0 %v314
        %1682 = vmatprep.subr.mxu0 0.0
        %1683 = vmatpush1.msra.mxu0 0.0
        %1684 = vmatprep.subr.mxu0 0.0
        %1685 = vmatpush1.msra.mxu0 0.0
        %1686 = vmatprep.subr.mxu0 0.0
        %1687 = vmatpush1.msra.mxu0 0.0
        %1688 = vmatprep.subr.mxu0 0.0
        %1689 = vmatpush1.msra.mxu0 0.0
        %1690 = vmatprep.subr.mxu0 0.0
        %1691 = vmatpush1.msra.mxu0 0.0
        %1692 = vmatprep.subr.mxu0 0.0
        %1693 = vmatpush1.msra.mxu0 0.0
        %1694 = vmatprep.subr.mxu0 0.0
        %1695 = vmatpush1.msra.mxu0 0.0
        %1696 = vmatprep.subr.mxu0 0.0
        %1697 = vmatpush1.msra.mxu0 0.0
        %1698 = vmatprep.subr.mxu0 0.0
        %1699 = vmatpush1.msra.mxu0 0.0
        %1700 = vmatprep.subr.mxu0 0.0
        %1701 = vmatpush1.msra.mxu0 0.0
        %1702 = vmatprep.subr.mxu0 0.0
        %1703 = vmatpush1.msra.mxu0 0.0
        %1704 = vmatprep.subr.mxu0 0.0
        %1705 = vmatpush1.msra.mxu0 0.0
        %1706 = vmatprep.subr.mxu0 0.0
        %1707 = vmatpush1.msra.mxu0 0.0
        %1708 = vmatprep.subr.mxu0 0.0
        %1709 = vmatpush1.msra.mxu0 0.0
        %1710 = vmatprep.subr.mxu0 0.0
        %1711 = vmatpush1.msra.mxu0 0.0
        %1712 = vmatprep.subr.mxu0 0.0
        %1713 = vmatpush1.msra.mxu0 0.0
        %1714 = vmatprep.subr.mxu0 0.0
        %1715 = vmatpush1.msra.mxu0 0.0
        %1716 = vmatprep.subr.mxu0 0.0
        %1717 = vmatpush1.msra.mxu0 0.0
        %1718 = vmatprep.subr.mxu0 0.0
        %1719 = vmatpush1.msra.mxu0 0.0
        %1720 = vmatprep.subr.mxu0 0.0
        %1721 = vmatpush1.msra.mxu0 0.0
        %1722 = vmatprep.subr.mxu0 0.0
        %1723 = vmatpush1.msra.mxu0 0.0
        %1724 = vmatprep.subr.mxu0 0.0
        %1725 = vmatpush1.msra.mxu0 0.0
        %1726 = vmatprep.subr.mxu0 0.0
        %1727 = vmatpush1.msra.mxu0 0.0
        %1728 = vmatprep.subr.mxu0 0.0
        %1729 = vmatpush1.msra.mxu0 0.0
        %1730 = vmatprep.subr.mxu0 0.0
        %1731 = vmatpush1.msra.mxu0 0.0
        %1732 = vmatprep.subr.mxu0 0.0
        %1733 = vmatpush1.msra.mxu0 0.0
        %1734 = vmatprep.subr.mxu0 0.0
        %1735 = vmatpush1.msra.mxu0 0.0
        %1736 = vmatprep.subr.mxu0 0.0
        %1737 = vmatpush1.msra.mxu0 0.0
        %1738 = vmatprep.subr.mxu0 0.0
        %1739 = vmatpush1.msra.mxu0 0.0
        %1740 = vmatprep.subr.mxu0 0.0
        %1741 = vmatpush1.msra.mxu0 0.0
        %1742 = vmatprep.mubr.f32.mxu0 0.0
        %1743 = vmatmul.mubr.f32.gmra.mrb[0].mxu0 %v1674
        %v1744 = vpop.f32.mrb[0].mxu0
        %v1745 = vadd.f32 0.0, %v1744
        %v1746 = vpop.f32.mrb[0].mxu0
        %1747 = vmatprep.mubr.f32.mxu0 0.0
        %1748 = vmatmul.mubr.f32.gmra.mrb[0].mxu0 %v1676
        %v1749 = vpop.f32.mrb[0].mxu0
        %v1750 = vadd.f32 0.0, %v1749
        %v1751 = vpop.f32.mrb[0].mxu0
        %1752 = vdwg.mxu0
        %v1755 = vcombine.high %v1745, %v1745
        %v1756 = vcombine.high %v1750, %v1750
        %v1759 = vmax.f32 %v1745, 0.0
        %v1760 = vmax.f32 %v1755, 0.0
        %v1761 = vmax.f32 %v1750, 0.0
        %v1762 = vmax.f32 %v1756, 0.0
        %v1763 = vmul.f32 %v1759, -0.5
        %v1764 = vmul.f32 %v1760, -0.5
        %v1765 = vmul.f32 %v1761, -0.5
        %v1766 = vmul.f32 %v1762, -0.5
        %v1767 = vmul.f32 %v1763, 1.442695
        %v1768 = vpow.pop %v1767
        %v1769 = vmul.f32 %v1764, 1.442695
        %v1770 = vpow.pop %v1769
        %v1771 = vmul.f32 %v1765, 1.442695
        %v1772 = vpow.pop %v1771
        %v1773 = vmul.f32 %v1766, 1.442695
        %v1774 = vpow.pop %v1773
        %v1775 = vsel %vm598, %v1768, 0.0
        %v1776 = vrot.slane %v1775, 4
        %v1777 = vadd.f32 %v1775, %v1776
        %v1778 = vrot.slane %v1777, 2
        %v1779 = vadd.f32 %v1777, %v1778
        %v1780 = vrot.slane %v1779, 1
        %v1781 = vadd.f32 %v1779, %v1780
        %v1782 = vsel %vm598, %v1770, 0.0
        %v1783 = vrot.slane %v1782, 4
        %v1784 = vadd.f32 %v1782, %v1783
        %v1785 = vrot.slane %v1784, 2
        %v1786 = vadd.f32 %v1784, %v1785
        %v1787 = vrot.slane %v1786, 1
        %v1788 = vadd.f32 %v1786, %v1787
        %v1789 = vsel %vm598, %v1772, 0.0
        %v1790 = vrot.slane %v1789, 4
        %v1791 = vadd.f32 %v1789, %v1790
        %v1792 = vrot.slane %v1791, 2
        %v1793 = vadd.f32 %v1791, %v1792
        %v1794 = vrot.slane %v1793, 1
        %v1795 = vadd.f32 %v1793, %v1794
        %v1796 = vsel %vm598, %v1774, 0.0
        %v1797 = vrot.slane %v1796, 4
        %v1798 = vadd.f32 %v1796, %v1797
        %v1799 = vrot.slane %v1798, 2
        %v1800 = vadd.f32 %v1798, %v1799
        %v1801 = vrot.slane %v1800, 1
        %v1802 = vadd.f32 %v1800, %v1801
        %v1803 = vmul.f32 %v1781, %v627
        %v1804 = vmul.f32 %v1788, %v627
        %v1805 = vmul.f32 %v1795, %v627
        %v1806 = vmul.f32 %v1802, %v627
        %s1807 = scalar_lea.vmem %s2, 12
        %v1808 = vld [vmem:[%s1807] sm:$0xf]
        %v1813 = vsel %vm476, %v1804, %v1803
        %v1814 = vsel %vm478, %v1805, %v1813
        %v1815 = vsel %vm480, %v1806, %v1814
        %v1817 = vsel %vm949, %v1808, 0
        %v1819 = vsel %vm953, %v1815, 0
        %1821 = vmatprep.subr.mxu0 0.0
        %1822 = vmatpush1.msra.mxu0 %v1819
        %1823 = vmatprep.subr.mxu0 0.0
        %1824 = vmatpush1.msra.mxu0 0.0
        %1825 = vmatprep.subr.mxu0 0.0
        %1826 = vmatpush1.msra.mxu0 0.0
        %1827 = vmatprep.subr.mxu0 0.0
        %1828 = vmatpush1.msra.mxu0 0.0
        %1829 = vmatprep.subr.mxu0 0.0
        %1830 = vmatpush1.msra.mxu0 0.0
        %1831 = vmatprep.subr.mxu0 0.0
        %1832 = vmatpush1.msra.mxu0 0.0
        %1833 = vmatprep.subr.mxu0 0.0
        %1834 = vmatpush1.msra.mxu0 0.0
        %1835 = vmatprep.subr.mxu0 0.0
        %1836 = vmatpush1.msra.mxu0 0.0
        %1837 = vmatprep.subr.mxu0 0.0
        %1838 = vmatpush1.msra.mxu0 0.0
        %1839 = vmatprep.subr.mxu0 0.0
        %1840 = vmatpush1.msra.mxu0 0.0
        %1841 = vmatprep.subr.mxu0 0.0
        %1842 = vmatpush1.msra.mxu0 0.0
        %1843 = vmatprep.subr.mxu0 0.0
        %1844 = vmatpush1.msra.mxu0 0.0
        %1845 = vmatprep.subr.mxu0 0.0
        %1846 = vmatpush1.msra.mxu0 0.0
        %1847 = vmatprep.subr.mxu0 0.0
        %1848 = vmatpush1.msra.mxu0 0.0
        %1849 = vmatprep.subr.mxu0 0.0
        %1850 = vmatpush1.msra.mxu0 0.0
        %1851 = vmatprep.subr.mxu0 0.0
        %1852 = vmatpush1.msra.mxu0 0.0
        %1853 = vmatprep.subr.mxu0 0.0
        %1854 = vmatpush1.msra.mxu0 0.0
        %1855 = vmatprep.subr.mxu0 0.0
        %1856 = vmatpush1.msra.mxu0 0.0
        %1857 = vmatprep.subr.mxu0 0.0
        %1858 = vmatpush1.msra.mxu0 0.0
        %1859 = vmatprep.subr.mxu0 0.0
        %1860 = vmatpush1.msra.mxu0 0.0
        %1861 = vmatprep.subr.mxu0 0.0
        %1862 = vmatpush1.msra.mxu0 0.0
        %1863 = vmatprep.subr.mxu0 0.0
        %1864 = vmatpush1.msra.mxu0 0.0
        %1865 = vmatprep.subr.mxu0 0.0
        %1866 = vmatpush1.msra.mxu0 0.0
        %1867 = vmatprep.subr.mxu0 0.0
        %1868 = vmatpush1.msra.mxu0 0.0
        %1869 = vmatprep.subr.mxu0 0.0
        %1870 = vmatpush1.msra.mxu0 0.0
        %1871 = vmatprep.subr.mxu0 0.0
        %1872 = vmatpush1.msra.mxu0 0.0
        %1873 = vmatprep.subr.mxu0 0.0
        %1874 = vmatpush1.msra.mxu0 0.0
        %1875 = vmatprep.subr.mxu0 0.0
        %1876 = vmatpush1.msra.mxu0 0.0
        %1877 = vmatprep.subr.mxu0 0.0
        %1878 = vmatpush1.msra.mxu0 0.0
        %1879 = vmatprep.subr.mxu0 0.0
        %1880 = vmatpush1.msra.mxu0 0.0
        %1881 = vmatprep.subr.mxu0 0.0
        %1882 = vmatpush1.msra.mxu0 0.0
        %1883 = vmatprep.subr.mxu0 0.0
        %1884 = vmatpush1.msra.mxu0 0.0
        %1885 = vmatprep.mubr.f32.mxu0 0.0
        %1886 = vmatmul.mubr.f32.gmra.mrb[0].mxu0 %v1817
        %v1887 = vpop.f32.mrb[0].mxu0
        %v1888 = vadd.f32 0.0, %v1887
        %v1889 = vpop.f32.mrb[0].mxu0
        %1890 = vdwg.mxu0
        %v1891 = vadd.f32 %v1499, %v1888
        %v1892 = vld [vmem:[%s3] sm:$0xf]
        %1894 = vset.pattern.permute.xlu0 0
        %1895 = vperm.xlu0 %1894, %v1892
        %v1896 = vpop.permute.xlu0 %1895
        %v1898 = vadd.f32 %v1891, %v1896
        %v1899 = vmax.f32 %v1898, 0.0
        %v1900 = vld [vmem:[%s4] sm:$0xff]
        %v1901 = vld [vmem:[%s4 + $0x8] sm:$0xff]
        %v1902 = vld [vmem:[%s5] sm:$0xff]
        %v1903 = vld [vmem:[%s5 + $0x8] sm:$0xff]
        %1905 = vset.pattern.permute.xlu0 0
        %1906 = vperm.xlu0 %1905, %v1902
        %v1907 = vpop.permute.xlu0 %1906
        %1910 = vset.pattern.permute.xlu0 0
        %1911 = vperm.xlu0 %1910, %v1903
        %v1912 = vpop.permute.xlu0 %1911
        %v1915 = vsel %vm949, %v1900, 0
        %v1918 = vsel %vm949, %v1901, 0
        %v1921 = vsel %vm953, %v1899, 0
        %1923 = vmatprep.subr.mxu0 0.0
        %1924 = vmatpush1.msra.mxu0 %v1921
        %1925 = vmatprep.subr.mxu0 0.0
        %1926 = vmatpush1.msra.mxu0 0.0
        %1927 = vmatprep.subr.mxu0 0.0
        %1928 = vmatpush1.msra.mxu0 0.0
        %1929 = vmatprep.subr.mxu0 0.0
        %1930 = vmatpush1.msra.mxu0 0.0
        %1931 = vmatprep.subr.mxu0 0.0
        %1932 = vmatpush1.msra.mxu0 0.0
        %1933 = vmatprep.subr.mxu0 0.0
        %1934 = vmatpush1.msra.mxu0 0.0
        %1935 = vmatprep.subr.mxu0 0.0
        %1936 = vmatpush1.msra.mxu0 0.0
        %1937 = vmatprep.subr.mxu0 0.0
        %1938 = vmatpush1.msra.mxu0 0.0
        %1939 = vmatprep.subr.mxu0 0.0
        %1940 = vmatpush1.msra.mxu0 0.0
        %1941 = vmatprep.subr.mxu0 0.0
        %1942 = vmatpush1.msra.mxu0 0.0
        %1943 = vmatprep.subr.mxu0 0.0
        %1944 = vmatpush1.msra.mxu0 0.0
        %1945 = vmatprep.subr.mxu0 0.0
        %1946 = vmatpush1.msra.mxu0 0.0
        %1947 = vmatprep.subr.mxu0 0.0
        %1948 = vmatpush1.msra.mxu0 0.0
        %1949 = vmatprep.subr.mxu0 0.0
        %1950 = vmatpush1.msra.mxu0 0.0
        %1951 = vmatprep.subr.mxu0 0.0
        %1952 = vmatpush1.msra.mxu0 0.0
        %1953 = vmatprep.subr.mxu0 0.0
        %1954 = vmatpush1.msra.mxu0 0.0
        %1955 = vmatprep.subr.mxu0 0.0
        %1956 = vmatpush1.msra.mxu0 0.0
        %1957 = vmatprep.subr.mxu0 0.0
        %1958 = vmatpush1.msra.mxu0 0.0
        %1959 = vmatprep.subr.mxu0 0.0
        %1960 = vmatpush1.msra.mxu0 0.0
        %1961 = vmatprep.subr.mxu0 0.0
        %1962 = vmatpush1.msra.mxu0 0.0
        %1963 = vmatprep.subr.mxu0 0.0
        %1964 = vmatpush1.msra.mxu0 0.0
        %1965 = vmatprep.subr.mxu0 0.0
        %1966 = vmatpush1.msra.mxu0 0.0
        %1967 = vmatprep.subr.mxu0 0.0
        %1968 = vmatpush1.msra.mxu0 0.0
        %1969 = vmatprep.subr.mxu0 0.0
        %1970 = vmatpush1.msra.mxu0 0.0
        %1971 = vmatprep.subr.mxu0 0.0
        %1972 = vmatpush1.msra.mxu0 0.0
        %1973 = vmatprep.subr.mxu0 0.0
        %1974 = vmatpush1.msra.mxu0 0.0
        %1975 = vmatprep.subr.mxu0 0.0
        %1976 = vmatpush1.msra.mxu0 0.0
        %1977 = vmatprep.subr.mxu0 0.0
        %1978 = vmatpush1.msra.mxu0 0.0
        %1979 = vmatprep.subr.mxu0 0.0
        %1980 = vmatpush1.msra.mxu0 0.0
        %1981 = vmatprep.subr.mxu0 0.0
        %1982 = vmatpush1.msra.mxu0 0.0
        %1983 = vmatprep.subr.mxu0 0.0
        %1984 = vmatpush1.msra.mxu0 0.0
        %1985 = vmatprep.subr.mxu0 0.0
        %1986 = vmatpush1.msra.mxu0 0.0
        %1987 = vmatprep.mubr.f32.mxu0 0.0
        %1988 = vmatmul.mubr.f32.gmra.mrb[0].mxu0 %v1915
        %v1989 = vpop.f32.mrb[0].mxu0
        %v1990 = vadd.f32 %v1907, %v1989
        %v1991 = vpop.f32.mrb[0].mxu0
        %1992 = vmatprep.mubr.f32.mxu0 0.0
        %1993 = vmatmul.mubr.f32.gmra.mrb[0].mxu0 %v1918
        %v1994 = vpop.f32.mrb[0].mxu0
        %v1995 = vadd.f32 %v1912, %v1994
        %v1996 = vpop.f32.mrb[0].mxu0
        %1997 = vdwg.mxu0
        %v1998 = vxor.u32 %v1990, 2147483648
        %v1999 = vxor.u32 %v1995, 2147483648
        %v2000 = vmul.f32 %v1998, 1.442695
        %v2001 = vpow.pop %v2000
        %v2002 = vmul.f32 %v1999, 1.442695
        %v2003 = vpow.pop %v2002
        %v2004 = vadd.f32 %v2001, 1.0
        %v2005 = vadd.f32 %v2003, 1.0
        %v2006 = vrcp.pop %v2004
        %v2007 = vmul.f32 1.0, %v2006
        %v2008 = vrcp.pop %v2005
        %v2009 = vmul.f32 1.0, %v2008
        %v2010 = vadd.f32 %v2007, 0.5
        %v2011 = vadd.f32 %v2009, 0.5
        %vm2012 = vcmask 15360
        %2013 = vst.msk [vmem:[%s296] sm:$0xff] %vm2012, %v2010
        %2014 = vst.msk [vmem:[%s296 + $0x8] sm:$0xff] %vm2012, %v2011
        %p2015 = scmp.lt.s32.totalorder %s24, 1
        %s2016 = scalar_select %p2015, %s24, 1
        %p2017 = scmp.lt.s32.totalorder %s25, 1
        %s2018 = scalar_select %p2017, %s25, 1
        %s2019 = smul.addr %s2018, 2
        %s2020 = smul.addr %s2016, 4
        %s2021 = sadd.s32 %s2019, %s2020
        %s2022 = smul.addr %s2021, 8
        %s2023 = scalar_lea.vmem %s6, %s2022
        // Predicated region
        $region49: #{tpu_custom_call.1} parent=43 // pred_check
          %p2024 = pneg %p185
        $region50: #{tpu_custom_call.1} parent=43 // pred_check_branch
          %2026 = sbr.rel (%p2024) target = $region52
        $region51: #{tpu_custom_call.1} parent=43 // pred_region
          _
        $region52: #{tpu_custom_call.1} parent=43 // pred_fallthru
          _
      $region44: #{tpu_custom_call.1} parent=5 // pred_fallthru
        _
      %p2027 = scmp.le.s32.totalorder 2, %s15
      // Predicated region
      $region53: #{tpu_custom_call.1} parent=5 // pred_check
        %p2028 = pneg %p2027
      $region54: #{tpu_custom_call.1} parent=5 // pred_check_branch
        %2030 = sbr.rel (%p2028) target = $region56
      $region55: #{tpu_custom_call.1} parent=5 // pred_region
        %s2031 = ssub.s32 %s15, 2
        // Predicated region
        $region57: #{tpu_custom_call.1} parent=55 // pred_check
          %p2032 = pneg %p191
        $region58: #{tpu_custom_call.1} parent=55 // pred_check_branch
          %2034 = sbr.rel (%p2032) target = $region60
        $region59: #{tpu_custom_call.1} parent=55 // pred_region
          %p2035 = scmp.lt.s32.totalorder %s26, 1
          %s2036 = scalar_select %p2035, %s26, 1
          %p2037 = scmp.lt.s32.totalorder %s27, 1
          %s2038 = scalar_select %p2037, %s27, 1
          %s2039 = smul.addr %s2038, 2
          %s2040 = smul.addr %s2036, 4
          %s2041 = sadd.s32 %s2039, %s2040
          %s2042 = smul.addr %s2041, 8
          %s2043 = scalar_lea.vmem %s6, %s2042
        $region60: #{tpu_custom_call.1} parent=55 // pred_fallthru
          _
      $region56: #{tpu_custom_call.1} parent=5 // pred_fallthru
        _
    $region6: #{tpu_custom_call.1} parent=1 // loop_footer
      %s19 = sadd.s32 1, %s15
    $region7: #{tpu_custom_call.1} parent=1 // loop_footer_branch
      %14 = sbr.rel target = $region3
    $region8: #{tpu_custom_call.1} parent=1 // loop_exit
      _
    %2044 = vsyncpa [#allocation3], 1
    %s2045 = scalar_lea.sflag [#allocation3], 1
    %2046 = vsyncpa %s2045, 1

</llo_original>
